<compile_context>
chip_gen: v5e
topology: v5e:2x2
jax: 0.10.0
libtpu: 0.0.40
codegen_flags: <defaults>
</compile_context>

<pallas_src>
import functools

import jax
import jax.numpy as jnp
from jax.experimental import pallas as pl
from jax.experimental.pallas import tpu as pltpu


# ----------------------------------------------------------------------------
# Layer 1 kernel:  T = relu(A_hat @ H @ W1 + b1) @ W2
#   grid = (N/TM, N/TK); K (second axis) is the reduction -> "arbitrary".
# ----------------------------------------------------------------------------
def _sage_layer1_kernel(a_ref, h_ref, w1_ref, b1_ref, w2_ref, t_ref, acc_ref):
    k = pl.program_id(1)

    @pl.when(k == 0)
    def _init():
        acc_ref[...] = jnp.zeros_like(acc_ref)

    # (TM, TK) bf16 @ (TK, IN_P) bf16 -> f32 accumulate on MXU.
    acc_ref[...] += jnp.dot(a_ref[...], h_ref[...],
                            preferred_element_type=jnp.float32)

    @pl.when(k == pl.num_programs(1) - 1)
    def _finalize():
        # Projection + bias + ReLU in f32, then immediately project by W2 so
        # the layer-2 aggregation runs at the (narrower) output width.
        h1 = jnp.maximum(
            jnp.dot(acc_ref[...], w1_ref[...],
                    preferred_element_type=jnp.float32) + b1_ref[...],
            0.0)
        t_ref[...] = jnp.dot(h1, w2_ref[...],
                             preferred_element_type=jnp.float32
                             ).astype(t_ref.dtype)


# ----------------------------------------------------------------------------
# Layer 2 kernel:  OUT = A_hat @ T + b2
# ----------------------------------------------------------------------------
def _sage_layer2_kernel(a_ref, t_ref, b2_ref, o_ref, acc_ref):
    k = pl.program_id(1)

    @pl.when(k == 0)
    def _init():
        acc_ref[...] = jnp.zeros_like(acc_ref)

    acc_ref[...] += jnp.dot(a_ref[...], t_ref[...],
                            preferred_element_type=jnp.float32)

    @pl.when(k == pl.num_programs(1) - 1)
    def _finalize():
        o_ref[...] = acc_ref[...] + b2_ref[...]


def _round_up(v, m):
    return ((v + m - 1) // m) * m


@functools.partial(jax.jit, static_argnames=("tile_m", "tile_k"))
def encoder_forward(adj, h, w1, b1, w2, b2, *, tile_m=128, tile_k=128):
    """adj: (N,N) dense adjacency, adj[i,j]=1 for edge j->i
       h:   (N,in) node features
       w1:  (in,hid)  = fc_neigh_1.weight.T ; b1: (hid,)
       w2:  (hid,out) = fc_neigh_2.weight.T ; b2: (out,)
       tile_m/tile_k: row / contraction tile (multiples of 128).  On v5e/v6e
       (128 MiB VMEM) these can be raised to 512-1024; keep <=512 on v7x."""
    n = adj.shape[0]
    in_sz, hid_sz = w1.shape
    out_sz = w2.shape[1]

    # Lane-dense padding of feature dims; row/col padding of the graph to the
    # tile size (padded rows/cols of A_hat are zero -> real rows unaffected).
    in_p = _round_up(in_sz, 128)
    hid_p = _round_up(hid_sz, 128)
    out_p = _round_up(out_sz, 128)
    n_p = _round_up(_round_up(n, tile_m), tile_k)

    adj = adj.astype(jnp.float32)
    deg = adj.sum(axis=1, keepdims=True)
    # Fold self-loop + 1/(deg+1) normalization into the adjacency (row scale).
    a_hat = (adj + jnp.eye(n, dtype=jnp.float32)) / (deg + 1.0)
    a_hat = jnp.pad(a_hat, ((0, n_p - n), (0, n_p - n))).astype(jnp.bfloat16)

    h_p = jnp.pad(h.astype(jnp.float32),
                  ((0, n_p - n), (0, in_p - in_sz))).astype(jnp.bfloat16)
    w1_p = jnp.pad(w1.astype(jnp.float32),
                   ((0, in_p - in_sz), (0, hid_p - hid_sz)))
    b1_p = jnp.pad(b1.reshape(1, -1).astype(jnp.float32),
                   ((0, 0), (0, hid_p - hid_sz)))
    w2_p = jnp.pad(w2.astype(jnp.float32),
                   ((0, hid_p - hid_sz), (0, out_p - out_sz)))
    b2_p = jnp.pad(b2.reshape(1, -1).astype(jnp.float32),
                   ((0, 0), (0, out_p - out_sz)))

    grid = (n_p // tile_m, n_p // tile_k)
    cparams = pltpu.CompilerParams(
        dimension_semantics=("parallel", "arbitrary"),
        vmem_limit_bytes=48 << 20,  # safe on v7x (64 MiB); raise on v5e/v6e
    )

    # ---- layer 1:  T = relu(A_hat @ H @ W1 + b1) @ W2  -> (N, out_p) bf16
    t = pl.pallas_call(
        _sage_layer1_kernel,
        out_shape=jax.ShapeDtypeStruct((n_p, out_p), jnp.bfloat16),
        grid_spec=pltpu.PrefetchScalarGridSpec(
            num_scalar_prefetch=0,
            grid=grid,
            in_specs=[
                pl.BlockSpec((tile_m, tile_k), lambda i, k: (i, k)),  # A_hat
                pl.BlockSpec((tile_k, in_p), lambda i, k: (k, 0)),    # H
                pl.BlockSpec((in_p, hid_p), lambda i, k: (0, 0)),     # W1
                pl.BlockSpec((1, hid_p), lambda i, k: (0, 0)),        # b1
                pl.BlockSpec((hid_p, out_p), lambda i, k: (0, 0)),    # W2
            ],
            out_specs=pl.BlockSpec((tile_m, out_p), lambda i, k: (i, 0)),
            scratch_shapes=[pltpu.VMEM((tile_m, in_p), jnp.float32)],
        ),
        compiler_params=cparams,
    )(a_hat, h_p, w1_p, b1_p, w2_p)

    # ---- layer 2:  OUT = A_hat @ T + b2  -> (N, out_p) f32
    out_full = pl.pallas_call(
        _sage_layer2_kernel,
        out_shape=jax.ShapeDtypeStruct((n_p, out_p), jnp.float32),
        grid_spec=pltpu.PrefetchScalarGridSpec(
            num_scalar_prefetch=0,
            grid=grid,
            in_specs=[
                pl.BlockSpec((tile_m, tile_k), lambda i, k: (i, k)),  # A_hat
                pl.BlockSpec((tile_k, out_p), lambda i, k: (k, 0)),   # T
                pl.BlockSpec((1, out_p), lambda i, k: (0, 0)),        # b2
            ],
            out_specs=pl.BlockSpec((tile_m, out_p), lambda i, k: (i, 0)),
            scratch_shapes=[pltpu.VMEM((tile_m, out_p), jnp.float32)],
        ),
        compiler_params=cparams,
    )(a_hat, t, b2_p)

    return out_full[:n, :out_sz]


def _reference(adj, h, w1, b1, w2, b2):
    deg = adj.sum(axis=1, keepdims=True)
    agg1 = (adj @ h + h) / (deg + 1.0)
    h1 = jnp.maximum(agg1 @ w1 + b1, 0.0)
    agg2 = (adj @ h1 + h1) / (deg + 1.0)
    return agg2 @ w2 + b2


if __name__ == "__main__":
    # Deterministic example: 256 nodes (exercises the 2x2 grid), in=8,
    # hid=16, out=8 — the module's actual feature sizes are tiny; the wrapper
    # pads them to 128 lanes.
    N, IN, HID, OUT = 256, 8, 16, 8
    key = jax.random.PRNGKey(0)
    k_adj, k_h, k_w1, k_b1, k_w2, k_b2 = jax.random.split(key, 6)

    # Deterministic random graph (no self-loops; the 'gcn' aggregator adds the
    # self contribution explicitly).
    adj = jax.random.bernoulli(k_adj, p=0.05, shape=(N, N)).astype(jnp.float32)
    adj = adj * (1.0 - jnp.eye(N, dtype=jnp.float32))

    h = jax.random.normal(k_h, (N, IN), dtype=jnp.float32)
    w1 = jax.random.normal(k_w1, (IN, HID), dtype=jnp.float32) / jnp.sqrt(IN)
    b1 = jax.random.normal(k_b1, (HID,), dtype=jnp.float32) * 0.01
    w2 = jax.random.normal(k_w2, (HID, OUT), dtype=jnp.float32) / jnp.sqrt(HID)
    b2 = jax.random.normal(k_b2, (OUT,), dtype=jnp.float32) * 0.01

    out = encoder_forward(adj, h, w1, b1, w2, b2)
    out = jax.block_until_ready(out)

    ref = _reference(adj, h, w1, b1.reshape(1, -1), w2, b2.reshape(1, -1))
    assert out.shape == (N, OUT)
    # bf16 adjacency/features on the MXU (f32 accumulation) -> ~1e-3..1e-2
    # relative drift vs the pure-f32 reference.
    max_err = jnp.max(jnp.abs(out - ref))
    assert jnp.allclose(out, ref, atol=2e-2, rtol=2e-2), f"max abs err {max_err}"

    print("KERNEL_OK")
</pallas_src>

<mosaic_0001>
module attributes {stable_mosaic.version = 11 : i64} {
  func.func @_sage_layer1_kernel(%arg0: i32, %arg1: i32, %arg2: memref<128x128xbf16, #tpu.memory_space<vmem>>, %arg3: memref<128x128xbf16, #tpu.memory_space<vmem>>, %arg4: memref<128x128xf32, #tpu.memory_space<vmem>>, %arg5: memref<1x128xf32, #tpu.memory_space<vmem>>, %arg6: memref<128x128xf32, #tpu.memory_space<vmem>>, %arg7: memref<128x128xbf16, #tpu.memory_space<vmem>>, %arg8: memref<128x128xf32, #tpu.memory_space<vmem>>) attributes {dimension_semantics = [#tpu.dimension_semantics<parallel>, #tpu.dimension_semantics<arbitrary>], iteration_bounds = array<i64: 2, 2>, scalar_prefetch = 0 : i64, scratch_operands = 1 : i64, tpu.core_type = #tpu.core_type<tc>, window_params = [{transform_indices = @transform_0, window_bounds = array<i64: 128, 128>}, {transform_indices = @transform_1, window_bounds = array<i64: 128, 128>}, {pipeline_mode = #tpu.pipeline_mode<synchronous>, transform_indices = @transform_2, window_bounds = array<i64: 128, 128>}, {pipeline_mode = #tpu.pipeline_mode<synchronous>, transform_indices = @transform_3, window_bounds = array<i64: 1, 128>}, {pipeline_mode = #tpu.pipeline_mode<synchronous>, transform_indices = @transform_4, window_bounds = array<i64: 128, 128>}, {transform_indices = @transform_5, window_bounds = array<i64: 128, 128>}]} {
    %c0_i32 = arith.constant 0 : i32
    %0 = arith.cmpi eq, %arg1, %c0_i32 : i32
    %1 = arith.extui %0 : i1 to i32
    %c0_i32_0 = arith.constant 0 : i32
    %2 = arith.cmpi ne, %1, %c0_i32_0 : i32
    scf.if %2 {
      %cst_9 = arith.constant 0.000000e+00 : f32
      %12 = vector.broadcast %cst_9 : f32 to vector<128x128xf32>
      %c0_10 = arith.constant 0 : index
      %c0_11 = arith.constant 0 : index
      %13 = vector.load %arg8[%c0_10, %c0_11] : memref<128x128xf32, #tpu.memory_space<vmem>>, vector<128x128xf32>
      tpu.vector_store %arg8[%c0_10, %c0_11], %12 {strides = array<i32>} : memref<128x128xf32, #tpu.memory_space<vmem>>, vector<128x128xf32>,
    } else {
    }
    %c0 = arith.constant 0 : index
    %c0_1 = arith.constant 0 : index
    %3 = vector.load %arg8[%c0, %c0_1] : memref<128x128xf32, #tpu.memory_space<vmem>>, vector<128x128xf32>
    %c0_2 = arith.constant 0 : index
    %c0_3 = arith.constant 0 : index
    %4 = vector.load %arg2[%c0_2, %c0_3] : memref<128x128xbf16, #tpu.memory_space<vmem>>, vector<128x128xbf16>
    %c0_4 = arith.constant 0 : index
    %c0_5 = arith.constant 0 : index
    %5 = vector.load %arg3[%c0_4, %c0_5] : memref<128x128xbf16, #tpu.memory_space<vmem>>, vector<128x128xbf16>
    %cst = arith.constant dense<0.000000e+00> : vector<128x128xf32>
    %6 = tpu.matmul %4, %5, %cst {dimension_numbers = #tpu.dot_dimension_numbers<[1], [0], [0], [1], [0, 0, 1, 1], [], []>} : vector<128x128xbf16>, vector<128x128xbf16>, vector<128x128xf32> -> vector<128x128xf32>
    %7 = arith.addf %3, %6 : vector<128x128xf32>
    %c0_6 = arith.constant 0 : index
    %c0_7 = arith.constant 0 : index
    %8 = vector.load %arg8[%c0_6, %c0_7] : memref<128x128xf32, #tpu.memory_space<vmem>>, vector<128x128xf32>
    tpu.vector_store %arg8[%c0_6, %c0_7], %7 {strides = array<i32>} : memref<128x128xf32, #tpu.memory_space<vmem>>, vector<128x128xf32>,
    %c1_i32 = arith.constant 1 : i32
    %9 = arith.cmpi eq, %arg1, %c1_i32 : i32
    %10 = arith.extui %9 : i1 to i32
    %c0_i32_8 = arith.constant 0 : i32
    %11 = arith.cmpi ne, %10, %c0_i32_8 : i32
    scf.if %11 {
      %c0_9 = arith.constant 0 : index
      %c0_10 = arith.constant 0 : index
      %12 = vector.load %arg8[%c0_9, %c0_10] : memref<128x128xf32, #tpu.memory_space<vmem>>, vector<128x128xf32>
      %c0_11 = arith.constant 0 : index
      %c0_12 = arith.constant 0 : index
      %13 = vector.load %arg4[%c0_11, %c0_12] : memref<128x128xf32, #tpu.memory_space<vmem>>, vector<128x128xf32>
      %cst_13 = arith.constant dense<0.000000e+00> : vector<128x128xf32>
      %14 = tpu.matmul %12, %13, %cst_13 {dimension_numbers = #tpu.dot_dimension_numbers<[1], [0], [0], [1], [0, 0, 1, 1], [], []>} : vector<128x128xf32>, vector<128x128xf32>, vector<128x128xf32> -> vector<128x128xf32>
      %c0_14 = arith.constant 0 : index
      %c0_15 = arith.constant 0 : index
      %15 = vector.load %arg5[%c0_14, %c0_15] : memref<1x128xf32, #tpu.memory_space<vmem>>, vector<1x128xf32>
      %16 = vector.broadcast %15 : vector<1x128xf32> to vector<128x128xf32>
      %17 = arith.addf %14, %16 : vector<128x128xf32>
      %cst_16 = arith.constant 0.000000e+00 : f32
      %18 = vector.broadcast %cst_16 : f32 to vector<128x128xf32>
      %19 = arith.maximumf %17, %18 : vector<128x128xf32>
      %c0_17 = arith.constant 0 : index
      %c0_18 = arith.constant 0 : index
      %20 = vector.load %arg6[%c0_17, %c0_18] : memref<128x128xf32, #tpu.memory_space<vmem>>, vector<128x128xf32>
      %cst_19 = arith.constant dense<0.000000e+00> : vector<128x128xf32>
      %21 = tpu.matmul %19, %20, %cst_19 {dimension_numbers = #tpu.dot_dimension_numbers<[1], [0], [0], [1], [0, 0, 1, 1], [], []>} : vector<128x128xf32>, vector<128x128xf32>, vector<128x128xf32> -> vector<128x128xf32>
      %22 = arith.truncf %21 : vector<128x128xf32> to vector<128x128xbf16>
      %c0_20 = arith.constant 0 : index
      %c0_21 = arith.constant 0 : index
      %23 = vector.load %arg7[%c0_20, %c0_21] : memref<128x128xbf16, #tpu.memory_space<vmem>>, vector<128x128xbf16>
      tpu.vector_store %arg7[%c0_20, %c0_21], %22 {strides = array<i32>} : memref<128x128xbf16, #tpu.memory_space<vmem>>, vector<128x128xbf16>,
    } else {
    }
    return
  }
  func.func @transform_0(%arg0: i32, %arg1: i32) -> (i32, i32) {
    %c0_i32 = arith.constant 0 : i32
    return %arg0, %arg1 : i32, i32
  }
  func.func @transform_1(%arg0: i32, %arg1: i32) -> (i32, i32) {
    %c0_i32 = arith.constant 0 : i32
    %c0_i32_0 = arith.constant 0 : i32
    return %arg1, %c0_i32 : i32, i32
  }
  func.func @transform_2(%arg0: i32, %arg1: i32) -> (i32, i32) {
    %c0_i32 = arith.constant 0 : i32
    %c0_i32_0 = arith.constant 0 : i32
    %c0_i32_1 = arith.constant 0 : i32
    return %c0_i32, %c0_i32_0 : i32, i32
  }
  func.func @transform_3(%arg0: i32, %arg1: i32) -> (i32, i32) {
    %c0_i32 = arith.constant 0 : i32
    %c0_i32_0 = arith.constant 0 : i32
    %c0_i32_1 = arith.constant 0 : i32
    return %c0_i32, %c0_i32_0 : i32, i32
  }
  func.func @transform_4(%arg0: i32, %arg1: i32) -> (i32, i32) {
    %c0_i32 = arith.constant 0 : i32
    %c0_i32_0 = arith.constant 0 : i32
    %c0_i32_1 = arith.constant 0 : i32
    return %c0_i32, %c0_i32_0 : i32, i32
  }
  func.func @transform_5(%arg0: i32, %arg1: i32) -> (i32, i32) {
    %c0_i32 = arith.constant 0 : i32
    %c0_i32_0 = arith.constant 0 : i32
    return %arg0, %c0_i32 : i32, i32
  }
}

module attributes {stable_mosaic.version = 11 : i64} {
  func.func @_sage_layer2_kernel(%arg0: i32, %arg1: i32, %arg2: memref<128x128xbf16, #tpu.memory_space<vmem>>, %arg3: memref<128x128xbf16, #tpu.memory_space<vmem>>, %arg4: memref<1x128xf32, #tpu.memory_space<vmem>>, %arg5: memref<128x128xf32, #tpu.memory_space<vmem>>, %arg6: memref<128x128xf32, #tpu.memory_space<vmem>>) attributes {dimension_semantics = [#tpu.dimension_semantics<parallel>, #tpu.dimension_semantics<arbitrary>], iteration_bounds = array<i64: 2, 2>, scalar_prefetch = 0 : i64, scratch_operands = 1 : i64, tpu.core_type = #tpu.core_type<tc>, window_params = [{transform_indices = @transform_0, window_bounds = array<i64: 128, 128>}, {transform_indices = @transform_1, window_bounds = array<i64: 128, 128>}, {pipeline_mode = #tpu.pipeline_mode<synchronous>, transform_indices = @transform_2, window_bounds = array<i64: 1, 128>}, {transform_indices = @transform_3, window_bounds = array<i64: 128, 128>}]} {
    %c0_i32 = arith.constant 0 : i32
    %0 = arith.cmpi eq, %arg1, %c0_i32 : i32
    %1 = arith.extui %0 : i1 to i32
    %c0_i32_0 = arith.constant 0 : i32
    %2 = arith.cmpi ne, %1, %c0_i32_0 : i32
    scf.if %2 {
      %cst_9 = arith.constant 0.000000e+00 : f32
      %12 = vector.broadcast %cst_9 : f32 to vector<128x128xf32>
      %c0_10 = arith.constant 0 : index
      %c0_11 = arith.constant 0 : index
      %13 = vector.load %arg6[%c0_10, %c0_11] : memref<128x128xf32, #tpu.memory_space<vmem>>, vector<128x128xf32>
      tpu.vector_store %arg6[%c0_10, %c0_11], %12 {strides = array<i32>} : memref<128x128xf32, #tpu.memory_space<vmem>>, vector<128x128xf32>,
    } else {
    }
    %c0 = arith.constant 0 : index
    %c0_1 = arith.constant 0 : index
    %3 = vector.load %arg6[%c0, %c0_1] : memref<128x128xf32, #tpu.memory_space<vmem>>, vector<128x128xf32>
    %c0_2 = arith.constant 0 : index
    %c0_3 = arith.constant 0 : index
    %4 = vector.load %arg2[%c0_2, %c0_3] : memref<128x128xbf16, #tpu.memory_space<vmem>>, vector<128x128xbf16>
    %c0_4 = arith.constant 0 : index
    %c0_5 = arith.constant 0 : index
    %5 = vector.load %arg3[%c0_4, %c0_5] : memref<128x128xbf16, #tpu.memory_space<vmem>>, vector<128x128xbf16>
    %cst = arith.constant dense<0.000000e+00> : vector<128x128xf32>
    %6 = tpu.matmul %4, %5, %cst {dimension_numbers = #tpu.dot_dimension_numbers<[1], [0], [0], [1], [0, 0, 1, 1], [], []>} : vector<128x128xbf16>, vector<128x128xbf16>, vector<128x128xf32> -> vector<128x128xf32>
    %7 = arith.addf %3, %6 : vector<128x128xf32>
    %c0_6 = arith.constant 0 : index
    %c0_7 = arith.constant 0 : index
    %8 = vector.load %arg6[%c0_6, %c0_7] : memref<128x128xf32, #tpu.memory_space<vmem>>, vector<128x128xf32>
    tpu.vector_store %arg6[%c0_6, %c0_7], %7 {strides = array<i32>} : memref<128x128xf32, #tpu.memory_space<vmem>>, vector<128x128xf32>,
    %c1_i32 = arith.constant 1 : i32
    %9 = arith.cmpi eq, %arg1, %c1_i32 : i32
    %10 = arith.extui %9 : i1 to i32
    %c0_i32_8 = arith.constant 0 : i32
    %11 = arith.cmpi ne, %10, %c0_i32_8 : i32
    scf.if %11 {
      %c0_9 = arith.constant 0 : index
      %c0_10 = arith.constant 0 : index
      %12 = vector.load %arg6[%c0_9, %c0_10] : memref<128x128xf32, #tpu.memory_space<vmem>>, vector<128x128xf32>
      %c0_11 = arith.constant 0 : index
      %c0_12 = arith.constant 0 : index
      %13 = vector.load %arg4[%c0_11, %c0_12] : memref<1x128xf32, #tpu.memory_space<vmem>>, vector<1x128xf32>
      %14 = vector.broadcast %13 : vector<1x128xf32> to vector<128x128xf32>
      %15 = arith.addf %12, %14 : vector<128x128xf32>
      %c0_13 = arith.constant 0 : index
      %c0_14 = arith.constant 0 : index
      %16 = vector.load %arg5[%c0_13, %c0_14] : memref<128x128xf32, #tpu.memory_space<vmem>>, vector<128x128xf32>
      tpu.vector_store %arg5[%c0_13, %c0_14], %15 {strides = array<i32>} : memref<128x128xf32, #tpu.memory_space<vmem>>, vector<128x128xf32>,
    } else {
    }
    return
  }
  func.func @transform_0(%arg0: i32, %arg1: i32) -> (i32, i32) {
    %c0_i32 = arith.constant 0 : i32
    return %arg0, %arg1 : i32, i32
  }
  func.func @transform_1(%arg0: i32, %arg1: i32) -> (i32, i32) {
    %c0_i32 = arith.constant 0 : i32
    %c0_i32_0 = arith.constant 0 : i32
    return %arg1, %c0_i32 : i32, i32
  }
  func.func @transform_2(%arg0: i32, %arg1: i32) -> (i32, i32) {
    %c0_i32 = arith.constant 0 : i32
    %c0_i32_0 = arith.constant 0 : i32
    %c0_i32_1 = arith.constant 0 : i32
    return %c0_i32, %c0_i32_0 : i32, i32
  }
  func.func @transform_3(%arg0: i32, %arg1: i32) -> (i32, i32) {
    %c0_i32 = arith.constant 0 : i32
    %c0_i32_0 = arith.constant 0 : i32
    return %arg0, %c0_i32 : i32, i32
  }
}

</mosaic_0001>

<llo_original>
// kernel: encoder_forward.3
$region0: #{encoder_forward.3}
  #allocation0 [shape = 'u32[]', space=smem, size = 0x4, offset = 0x4, fixed_abs, tag = 'smem constant byte address 0x4 - core index']
  #allocation1 [shape = 'u32[72,128]{1,0:T(1,128)}', space=vmem, size = 0x9000, scoped, tag = 'internal scratch']
  #allocation2 [shape = 'f32[128,128]{1,0:T(8,128)}', space=vmem, size = 0x10000, scoped, tag = 'scratch operand']
  %s0 = inlined_call_operand.vmem [shape: bf16[256,256], index: 0, kind: input, shape index: {}]
  %s1 = inlined_call_operand.vmem [shape: bf16[256,128], index: 1, kind: input, shape index: {}]
  %s2 = inlined_call_operand.vmem [shape: f32[1,128], index: 2, kind: input, shape index: {}]
  %s3 = inlined_call_operand.vmem [shape: f32[256,128], index: 3, kind: output, shape index: {}]
  %s4 = sld [smem:[#allocation0]]
  $region94: #{encoder_forward.3} parent=0
    _
  %s6 = ssub.s32 1, %s4
  %s7 = scalar_select 0, %s6, %s4
  $region1: #{encoder_forward.3} parent=0
    #allocation3 [shape = 'u8[65536]{0}', space=vmem, size = 0x10000, scoped, tag = 'input window, operand 0']
    loop: start=0, step=1, limit=6
    $region2: #{encoder_forward.3} parent=1 // loop_pre_header
      _
    $region3: #{encoder_forward.3} parent=1 // loop_header
      %s9 = sphi 0, %s13
      %p10 = scmp.ge.s32.totalorder %s9, 6
      %s16 = sphi 0, %s28
      %s17 = sphi 0, %s24
      %s18 = sphi 0, %s16
      %s19 = sphi 0, %s17
      %s20 = sphi 0, %s18
      %s21 = sphi 0, %s19
      %s33 = sphi 0, %s35
      %s36 = sphi 0, %s33
      %s37 = sphi 0, %s36
      %s53 = sphi 0, %s37
      %s59 = sphi 0, %s61
      %s62 = sphi 0, %s59
      %s63 = sphi 0, %s62
      %s79 = sphi 0, %s63
      %s83 = sphi 0, %s83
      %s85 = sphi 0, %s83
      %s86 = sphi 0, %s85
      %s100 = sphi 0, %s86
      %s106 = sphi 0, %s108
      %s109 = sphi 0, %s106
      %s110 = sphi 0, %s109
      %s126 = sphi 0, %s110
    $region4: #{encoder_forward.3} parent=1 // loop_header_branch
      %12 = sbr.rel (%p10) target = $region8
    $region5: #{encoder_forward.3} parent=1 // loop_body
      %s14 = ssub.s32 %s9, 1
      %s15 = ssub.s32 %s9, 2
      %s22 = sadd.s32 1, %s17
      %p23 = scmp.ge.s32.totalorder %s22, 2
      %s24 = scalar_select %p23, 0, %s22
      %s25 = sadd.s32 1, %s16
      %s26 = scalar_select %p23, %s25, %s16
      %p27 = scmp.ge.s32.totalorder %s26, 2
      %s28 = scalar_select %p27, 0, %s26
      %s29 = ssub.s32 %s16, %s28
      %s30 = ssub.s32 %s17, %s24
      %s31 = sor.u32 %s29, %s30
      %p32 = scmp.eq.s32.totalorder %s31, 0
      %s34 = sadd.s32 %s33, 1
      %s35 = scalar_select %p32, %s33, %s34
      %p38 = pneg %p32
      %p39 = scmp.eq.s32.totalorder %s9, 3
      %p40 = por %p38, %p39
      %p41 = scmp.ne.s32.totalorder %s33, %s36
      %p42 = scmp.eq.s32.totalorder %s9, 0
      %p43 = por %p41, %p42
      %p44 = scmp.ne.s32.totalorder %s33, %s36
      %p45 = scmp.eq.s32.totalorder %s14, 3
      %p46 = por %p44, %p45
      %p47 = scmp.ne.s32.totalorder %s36, %s37
      %p48 = scmp.eq.s32.totalorder %s14, 0
      %p49 = por %p47, %p48
      %p50 = scmp.ne.s32.totalorder %s36, %s37
      %p51 = scmp.eq.s32.totalorder %s15, 3
      %p52 = por %p50, %p51
      %p54 = scmp.ne.s32.totalorder %s37, %s53
      %p55 = scmp.eq.s32.totalorder %s15, 0
      %p56 = por %p54, %p55
      %s57 = ssub.s32 %s17, %s24
      %p58 = scmp.eq.s32.totalorder %s57, 0
      %s60 = sadd.s32 %s59, 1
      %s61 = scalar_select %p58, %s59, %s60
      %p64 = pneg %p58
      %p65 = scmp.eq.s32.totalorder %s9, 3
      %p66 = por %p64, %p65
      %p67 = scmp.ne.s32.totalorder %s59, %s62
      %p68 = scmp.eq.s32.totalorder %s9, 0
      %p69 = por %p67, %p68
      %p70 = scmp.ne.s32.totalorder %s59, %s62
      %p71 = scmp.eq.s32.totalorder %s14, 3
      %p72 = por %p70, %p71
      %p73 = scmp.ne.s32.totalorder %s62, %s63
      %p74 = scmp.eq.s32.totalorder %s14, 0
      %p75 = por %p73, %p74
      %p76 = scmp.ne.s32.totalorder %s62, %s63
      %p77 = scmp.eq.s32.totalorder %s15, 3
      %p78 = por %p76, %p77
      %p80 = scmp.ne.s32.totalorder %s63, %s79
      %p81 = scmp.eq.s32.totalorder %s15, 0
      %p82 = por %p80, %p81
      %s84 = sadd.s32 %s83, 1
      %p87 = scmp.eq.s32.totalorder %s9, 3
      %p88 = scmp.ne.s32.totalorder %s83, %s85
      %p89 = scmp.eq.s32.totalorder %s9, 0
      %p90 = por %p88, %p89
      %p91 = scmp.ne.s32.totalorder %s83, %s85
      %p92 = scmp.eq.s32.totalorder %s14, 3
      %p93 = por %p91, %p92
      %p94 = scmp.ne.s32.totalorder %s85, %s86
      %p95 = scmp.eq.s32.totalorder %s14, 0
      %p96 = por %p94, %p95
      %p97 = scmp.ne.s32.totalorder %s85, %s86
      %p98 = scmp.eq.s32.totalorder %s15, 3
      %p99 = por %p97, %p98
      %p101 = scmp.ne.s32.totalorder %s86, %s100
      %p102 = scmp.eq.s32.totalorder %s15, 0
      %p103 = por %p101, %p102
      %s104 = ssub.s32 %s16, %s28
      %p105 = scmp.eq.s32.totalorder %s104, 0
      %s107 = sadd.s32 %s106, 1
      %s108 = scalar_select %p105, %s106, %s107
      %p111 = pneg %p105
      %p112 = scmp.eq.s32.totalorder %s9, 3
      %p113 = por %p111, %p112
      %p114 = scmp.ne.s32.totalorder %s106, %s109
      %p115 = scmp.eq.s32.totalorder %s9, 0
      %p116 = por %p114, %p115
      %p117 = scmp.ne.s32.totalorder %s106, %s109
      %p118 = scmp.eq.s32.totalorder %s14, 3
      %p119 = por %p117, %p118
      %p120 = scmp.ne.s32.totalorder %s109, %s110
      %p121 = scmp.eq.s32.totalorder %s14, 0
      %p122 = por %p120, %p121
      %p123 = scmp.ne.s32.totalorder %s109, %s110
      %p124 = scmp.eq.s32.totalorder %s15, 3
      %p125 = por %p123, %p124
      %p127 = scmp.ne.s32.totalorder %s110, %s126
      %p128 = scmp.eq.s32.totalorder %s15, 0
      %p129 = por %p127, %p128
      %p130 = scmp.le.s32.totalorder 1, %s9
      %p131 = scmp.lt.s32.totalorder %s9, 5
      %p132 = pnand %p130, %p131
      %p133 = pneg %p132
      // Predicated region
      $region9: #{encoder_forward.3} parent=5 // pred_check
        _
      $region10: #{encoder_forward.3} parent=5 // pred_check_branch
        %135 = sbr.rel (%p132) target = $region12
      $region11: #{encoder_forward.3} parent=5 // pred_region
        %s136 = ssub.s32 %s9, 1
        // Predicated region
        $region13: #{encoder_forward.3} parent=11 // pred_check
          %p137 = pneg %p96
        $region14: #{encoder_forward.3} parent=11 // pred_check_branch
          %139 = sbr.rel (%p137) target = $region16
        $region15: #{encoder_forward.3} parent=11 // pred_region
          _
        $region16: #{encoder_forward.3} parent=11 // pred_fallthru
          _
      $region12: #{encoder_forward.3} parent=5 // pred_fallthru
        _
      %p140 = scmp.lt.s32.totalorder %s9, 4
      // Predicated region
      $region17: #{encoder_forward.3} parent=5 // pred_check
        %p141 = pneg %p140
      $region18: #{encoder_forward.3} parent=5 // pred_check_branch
        %143 = sbr.rel (%p141) target = $region20
      $region19: #{encoder_forward.3} parent=5 // pred_region
        // Predicated region
        $region21: #{encoder_forward.3} parent=19 // pred_check
          %p144 = pneg %p43
        $region22: #{encoder_forward.3} parent=19 // pred_check_branch
          %146 = sbr.rel (%p144) target = $region24
        $region23: #{encoder_forward.3} parent=19 // pred_region
          %s147 = sand.u32 %s33, 1
          %s148 = sand.u32 %s33, 1
          %s149 = smul.addr %s148, 64
          %s150 = scalar_lea.vmem [#allocation3], %s149
          %s151 = smul.u32 16, %s16
          %s152 = smul.addr %s151, 2
          %s153 = sadd.s32 %s17, %s152
          %s154 = smul.addr %s153, 4
          %s155 = scalar_lea.vmem %s0, %s154
          // Predicated region
          $region25: #{encoder_forward.3} parent=23 // pred_check
            _
          $region26: #{encoder_forward.3} parent=23 // pred_check_branch
            %157 = sbr.rel (0) target = $region28
          $region27: #{encoder_forward.3} parent=23 // pred_region
            // Predicated region
            $region29: #{encoder_forward.3} parent=27 // pred_check
              _
            $region30: #{encoder_forward.3} parent=27 // pred_check_branch
              %159 = sbr.rel target = $region32
            $region31: #{encoder_forward.3} parent=27 // pred_region
              // Predicated region
              $region44: #{encoder_forward.3} parent=31 // pred_check
                _
              $region45: #{encoder_forward.3} parent=31 // pred_check_branch
                %205 = sbr.rel (0) target = $region47
              $region46: #{encoder_forward.3} parent=31 // pred_region
                loop: start=0, step=1, limit=1
                $region48: #{encoder_forward.3} parent=46 // loop_pre_header
                  _
                $region49: #{encoder_forward.3} parent=46 // loop_header
                  %s207 = sphi 0, %s211
                  %p208 = scmp.ge.s32.totalorder %s207, 1
                  %s212 = sphi %s155, %s155
                  %s213 = sphi %s150, %s150
                $region50: #{encoder_forward.3} parent=46 // loop_header_branch
                  %210 = sbr.rel (%p208) target = $region54
                $region51: #{encoder_forward.3} parent=46 // loop_body
                  _
                $region52: #{encoder_forward.3} parent=46 // loop_footer
                  %s211 = sadd.s32 1, %s207
                $region53: #{encoder_forward.3} parent=46 // loop_footer_branch
                  %206 = sbr.rel target = $region49
                $region54: #{encoder_forward.3} parent=46 // loop_exit
                  _
                %s215 = ssub.s32 16, 1
                loop: start=0, step=1, limit=1
                $region55: #{encoder_forward.3} parent=46 // loop_pre_header
                  _
                $region56: #{encoder_forward.3} parent=46 // loop_header
                  %s217 = sphi 0, %s221
                  %p218 = scmp.ge.s32.totalorder %s217, 1
                  %s222 = sphi %s155, %s155
                  %s223 = sphi %s150, %s150
                $region57: #{encoder_forward.3} parent=46 // loop_header_branch
                  %220 = sbr.rel (%p218) target = $region61
                $region58: #{encoder_forward.3} parent=46 // loop_body
                  %v224 = vld [vmem:[%s222] sm:%s215]
                  %225 = vst [vmem:[%s223] sm:%s215] %v224
                  %v226 = vld [vmem:[%s222 + $0x8] sm:%s215]
                  %227 = vst [vmem:[%s223 + $0x4] sm:%s215] %v226
                  %v228 = vld [vmem:[%s222 + $0x10] sm:%s215]
                  %229 = vst [vmem:[%s223 + $0x8] sm:%s215] %v228
                  %v230 = vld [vmem:[%s222 + $0x18] sm:%s215]
                  %231 = vst [vmem:[%s223 + $0xc] sm:%s215] %v230
                  %v232 = vld [vmem:[%s222 + $0x20] sm:%s215]
                  %233 = vst [vmem:[%s223 + $0x10] sm:%s215] %v232
                  %v234 = vld [vmem:[%s222 + $0x28] sm:%s215]
                  %235 = vst [vmem:[%s223 + $0x14] sm:%s215] %v234
                  %v236 = vld [vmem:[%s222 + $0x30] sm:%s215]
                  %237 = vst [vmem:[%s223 + $0x18] sm:%s215] %v236
                  %v238 = vld [vmem:[%s222 + $0x38] sm:%s215]
                  %239 = vst [vmem:[%s223 + $0x1c] sm:%s215] %v238
                  %v240 = vld [vmem:[%s222 + $0x40] sm:%s215]
                  %241 = vst [vmem:[%s223 + $0x20] sm:%s215] %v240
                  %v242 = vld [vmem:[%s222 + $0x48] sm:%s215]
                  %243 = vst [vmem:[%s223 + $0x24] sm:%s215] %v242
                  %v244 = vld [vmem:[%s222 + $0x50] sm:%s215]
                  %245 = vst [vmem:[%s223 + $0x28] sm:%s215] %v244
                  %v246 = vld [vmem:[%s222 + $0x58] sm:%s215]
                  %247 = vst [vmem:[%s223 + $0x2c] sm:%s215] %v246
                  %v248 = vld [vmem:[%s222 + $0x60] sm:%s215]
                  %249 = vst [vmem:[%s223 + $0x30] sm:%s215] %v248
                  %v250 = vld [vmem:[%s222 + $0x68] sm:%s215]
                  %251 = vst [vmem:[%s223 + $0x34] sm:%s215] %v250
                  %v252 = vld [vmem:[%s222 + $0x70] sm:%s215]
                  %253 = vst [vmem:[%s223 + $0x38] sm:%s215] %v252
                  %v254 = vld [vmem:[%s222 + $0x78] sm:%s215]
                  %255 = vst [vmem:[%s223 + $0x3c] sm:%s215] %v254
                $region59: #{encoder_forward.3} parent=46 // loop_footer
                  %s221 = sadd.s32 1, %s217
                $region60: #{encoder_forward.3} parent=46 // loop_footer_branch
                  %216 = sbr.rel target = $region56
                $region61: #{encoder_forward.3} parent=46 // loop_exit
                  _
              $region47: #{encoder_forward.3} parent=31 // pred_fallthru
                _
            $region32: #{encoder_forward.3} parent=27 // pred_fallthru
              _
            // Predicated region
            $region33: #{encoder_forward.3} parent=27 // pred_check
              _
            $region34: #{encoder_forward.3} parent=27 // pred_check_branch
              %161 = sbr.rel (0) target = $region36
            $region35: #{encoder_forward.3} parent=27 // pred_region
              %s163 = ssub.s32 16, 1
              loop: start=0, step=1, limit=1
              $region37: #{encoder_forward.3} parent=35 // loop_pre_header
                _
              $region38: #{encoder_forward.3} parent=35 // loop_header
                %s165 = sphi 0, %s169
                %p166 = scmp.ge.s32.totalorder %s165, 1
                %s170 = sphi %s155, %s155
                %s171 = sphi %s150, %s150
              $region39: #{encoder_forward.3} parent=35 // loop_header_branch
                %168 = sbr.rel (%p166) target = $region43
              $region40: #{encoder_forward.3} parent=35 // loop_body
                %v172 = vld [vmem:[%s170] sm:%s163]
                %173 = vst [vmem:[%s171] sm:%s163] %v172
                %v174 = vld [vmem:[%s170 + $0x8] sm:%s163]
                %175 = vst [vmem:[%s171 + $0x4] sm:%s163] %v174
                %v176 = vld [vmem:[%s170 + $0x10] sm:%s163]
                %177 = vst [vmem:[%s171 + $0x8] sm:%s163] %v176
                %v178 = vld [vmem:[%s170 + $0x18] sm:%s163]
                %179 = vst [vmem:[%s171 + $0xc] sm:%s163] %v178
                %v180 = vld [vmem:[%s170 + $0x20] sm:%s163]
                %181 = vst [vmem:[%s171 + $0x10] sm:%s163] %v180
                %v182 = vld [vmem:[%s170 + $0x28] sm:%s163]
                %183 = vst [vmem:[%s171 + $0x14] sm:%s163] %v182
                %v184 = vld [vmem:[%s170 + $0x30] sm:%s163]
                %185 = vst [vmem:[%s171 + $0x18] sm:%s163] %v184
                %v186 = vld [vmem:[%s170 + $0x38] sm:%s163]
                %187 = vst [vmem:[%s171 + $0x1c] sm:%s163] %v186
                %v188 = vld [vmem:[%s170 + $0x40] sm:%s163]
                %189 = vst [vmem:[%s171 + $0x20] sm:%s163] %v188
                %v190 = vld [vmem:[%s170 + $0x48] sm:%s163]
                %191 = vst [vmem:[%s171 + $0x24] sm:%s163] %v190
                %v192 = vld [vmem:[%s170 + $0x50] sm:%s163]
                %193 = vst [vmem:[%s171 + $0x28] sm:%s163] %v192
                %v194 = vld [vmem:[%s170 + $0x58] sm:%s163]
                %195 = vst [vmem:[%s171 + $0x2c] sm:%s163] %v194
                %v196 = vld [vmem:[%s170 + $0x60] sm:%s163]
                %197 = vst [vmem:[%s171 + $0x30] sm:%s163] %v196
                %v198 = vld [vmem:[%s170 + $0x68] sm:%s163]
                %199 = vst [vmem:[%s171 + $0x34] sm:%s163] %v198
                %v200 = vld [vmem:[%s170 + $0x70] sm:%s163]
                %201 = vst [vmem:[%s171 + $0x38] sm:%s163] %v200
                %v202 = vld [vmem:[%s170 + $0x78] sm:%s163]
                %203 = vst [vmem:[%s171 + $0x3c] sm:%s163] %v202
              $region41: #{encoder_forward.3} parent=35 // loop_footer
                %s169 = sadd.s32 1, %s165
              $region42: #{encoder_forward.3} parent=35 // loop_footer_branch
                %164 = sbr.rel target = $region38
              $region43: #{encoder_forward.3} parent=35 // loop_exit
                _
            $region36: #{encoder_forward.3} parent=27 // pred_fallthru
              _
          $region28: #{encoder_forward.3} parent=23 // pred_fallthru
            _
          %256 = vnop
        $region24: #{encoder_forward.3} parent=19 // pred_fallthru
          _
        // Predicated region
        $region62: #{encoder_forward.3} parent=19 // pred_check
          %p257 = pneg %p69
        $region63: #{encoder_forward.3} parent=19 // pred_check_branch
          %259 = sbr.rel (%p257) target = $region65
        $region64: #{encoder_forward.3} parent=19 // pred_region
          %s260 = smul.u32 16, %s17
          %p261 = scmp.lt.s32.totalorder %s260, 31
          %s262 = scalar_select %p261, %s260, 31
          %s263 = smul.addr %s262, 4
          %s264 = scalar_lea.vmem %s1, %s263
          %s265 = smul.u32 16, %s17
        $region65: #{encoder_forward.3} parent=19 // pred_fallthru
          _
      $region20: #{encoder_forward.3} parent=5 // pred_fallthru
        _
      %p266 = scmp.le.s32.totalorder 1, %s9
      %p267 = scmp.lt.s32.totalorder %s9, 5
      %p268 = pnand %p266, %p267
      %p269 = pneg %p268
      // Predicated region
      $region66: #{encoder_forward.3} parent=5 // pred_check
        _
      $region67: #{encoder_forward.3} parent=5 // pred_check_branch
        %271 = sbr.rel (%p268) target = $region69
      $region68: #{encoder_forward.3} parent=5 // pred_region
        %s272 = ssub.s32 %s9, 1
        %s273 = sand.u32 %s36, 1
        %s274 = sand.u32 %s36, 1
        %s275 = smul.addr %s274, 64
        %s276 = scalar_lea.vmem [#allocation3], %s275
        // Predicated region
        $region70: #{encoder_forward.3} parent=68 // pred_check
          %p277 = pneg %p49
        $region71: #{encoder_forward.3} parent=68 // pred_check_branch
          %279 = sbr.rel (%p277) target = $region73
        $region72: #{encoder_forward.3} parent=68 // pred_region
          _
        $region73: #{encoder_forward.3} parent=68 // pred_fallthru
          _
        %s280 = sand.u32 %s36, 1
        %s281 = sand.u32 %s36, 1
        %s282 = smul.addr %s281, 64
        %s283 = scalar_lea.vmem [#allocation3], %s282
        %p284 = pneg %p49
        %p285 = pneg %p46
        %s286 = smul.u32 16, %s19
        %p287 = scmp.lt.s32.totalorder %s286, 31
        %s288 = scalar_select %p287, %s286, 31
        %s289 = smul.addr %s288, 4
        %s290 = scalar_lea.vmem %s1, %s289
        %p291 = pneg %p75
        %p292 = pneg %p72
        %p293 = pneg %p96
        %p294 = pneg %p93
        %p295 = pneg %p122
        %p296 = pneg %p119
        %s297 = smul.u32 16, %s18
        %p298 = scmp.lt.s32.totalorder %s297, 31
        %s299 = scalar_select %p298, %s297, 31
        %s300 = smul.addr %s299, 8
        %s301 = scalar_lea.vmem %s3, %s300
        %s302 = smul.u32 16, %s18
        %s303 = smul.u32 16, %s19
        %p304 = scmp.lt.s32.totalorder %s303, 31
        %s305 = scalar_select %p304, %s303, 31
        %s306 = smul.addr %s305, 4
        %s307 = scalar_lea.vmem %s1, %s306
        %s308 = smul.u32 16, %s19
        %s309 = smul.u32 16, %s18
        %p310 = scmp.lt.s32.totalorder %s309, 31
        %s311 = scalar_select %p310, %s309, 31
        %s312 = smul.addr %s311, 8
        %s313 = scalar_lea.vmem %s3, %s312
        %s314 = smul.u32 16, %s18
        %p315 = scmp.eq.s32.totalorder %s19, 0
        // Predicated region
        $region74: #{encoder_forward.3} parent=68 // pred_check
          %p316 = pneg %p315
        $region75: #{encoder_forward.3} parent=68 // pred_check_branch
          %318 = sbr.rel (%p316) target = $region77
        $region76: #{encoder_forward.3} parent=68 // pred_region
          %319 = vst [vmem:[#allocation2] sm:$0xff] 0.0
          %320 = vst [vmem:[#allocation2 + $0x8] sm:$0xff] 0.0
          %321 = vst [vmem:[#allocation2 + $0x10] sm:$0xff] 0.0
          %322 = vst [vmem:[#allocation2 + $0x18] sm:$0xff] 0.0
          %323 = vst [vmem:[#allocation2 + $0x20] sm:$0xff] 0.0
          %324 = vst [vmem:[#allocation2 + $0x28] sm:$0xff] 0.0
          %325 = vst [vmem:[#allocation2 + $0x30] sm:$0xff] 0.0
          %326 = vst [vmem:[#allocation2 + $0x38] sm:$0xff] 0.0
          %327 = vst [vmem:[#allocation2 + $0x40] sm:$0xff] 0.0
          %328 = vst [vmem:[#allocation2 + $0x48] sm:$0xff] 0.0
          %329 = vst [vmem:[#allocation2 + $0x50] sm:$0xff] 0.0
          %330 = vst [vmem:[#allocation2 + $0x58] sm:$0xff] 0.0
          %331 = vst [vmem:[#allocation2 + $0x60] sm:$0xff] 0.0
          %332 = vst [vmem:[#allocation2 + $0x68] sm:$0xff] 0.0
          %333 = vst [vmem:[#allocation2 + $0x70] sm:$0xff] 0.0
          %334 = vst [vmem:[#allocation2 + $0x78] sm:$0xff] 0.0
        $region77: #{encoder_forward.3} parent=68 // pred_fallthru
          _
        %v335 = vld [vmem:[#allocation2] sm:$0xff]
        %v336 = vld [vmem:[#allocation2 + $0x8] sm:$0xff]
        %v337 = vld [vmem:[#allocation2 + $0x10] sm:$0xff]
        %v338 = vld [vmem:[#allocation2 + $0x18] sm:$0xff]
        %v339 = vld [vmem:[#allocation2 + $0x20] sm:$0xff]
        %v340 = vld [vmem:[#allocation2 + $0x28] sm:$0xff]
        %v341 = vld [vmem:[#allocation2 + $0x30] sm:$0xff]
        %v342 = vld [vmem:[#allocation2 + $0x38] sm:$0xff]
        %v343 = vld [vmem:[#allocation2 + $0x40] sm:$0xff]
        %v344 = vld [vmem:[#allocation2 + $0x48] sm:$0xff]
        %v345 = vld [vmem:[#allocation2 + $0x50] sm:$0xff]
        %v346 = vld [vmem:[#allocation2 + $0x58] sm:$0xff]
        %v347 = vld [vmem:[#allocation2 + $0x60] sm:$0xff]
        %v348 = vld [vmem:[#allocation2 + $0x68] sm:$0xff]
        %v349 = vld [vmem:[#allocation2 + $0x70] sm:$0xff]
        %v350 = vld [vmem:[#allocation2 + $0x78] sm:$0xff]
        %v351 = vld [vmem:[%s276] sm:$0xf]
        %v352 = vld [vmem:[%s276 + $0x4] sm:$0xf]
        %v353 = vld [vmem:[%s276 + $0x8] sm:$0xf]
        %v354 = vld [vmem:[%s276 + $0xc] sm:$0xf]
        %v355 = vld [vmem:[%s276 + $0x10] sm:$0xf]
        %v356 = vld [vmem:[%s276 + $0x14] sm:$0xf]
        %v357 = vld [vmem:[%s276 + $0x18] sm:$0xf]
        %v358 = vld [vmem:[%s276 + $0x1c] sm:$0xf]
        %v359 = vld [vmem:[%s276 + $0x20] sm:$0xf]
        %v360 = vld [vmem:[%s276 + $0x24] sm:$0xf]
        %v361 = vld [vmem:[%s276 + $0x28] sm:$0xf]
        %v362 = vld [vmem:[%s276 + $0x2c] sm:$0xf]
        %v363 = vld [vmem:[%s276 + $0x30] sm:$0xf]
        %v364 = vld [vmem:[%s276 + $0x34] sm:$0xf]
        %v365 = vld [vmem:[%s276 + $0x38] sm:$0xf]
        %v366 = vld [vmem:[%s276 + $0x3c] sm:$0xf]
        %v367 = vld [vmem:[%s307] sm:$0xf]
        %v368 = vld [vmem:[%s307 + $0x4] sm:$0xf]
        %v369 = vld [vmem:[%s307 + $0x8] sm:$0xf]
        %v370 = vld [vmem:[%s307 + $0xc] sm:$0xf]
        %v371 = vld [vmem:[%s307 + $0x10] sm:$0xf]
        %v372 = vld [vmem:[%s307 + $0x14] sm:$0xf]
        %v373 = vld [vmem:[%s307 + $0x18] sm:$0xf]
        %v374 = vld [vmem:[%s307 + $0x1c] sm:$0xf]
        %v375 = vld [vmem:[%s307 + $0x20] sm:$0xf]
        %v376 = vld [vmem:[%s307 + $0x24] sm:$0xf]
        %v377 = vld [vmem:[%s307 + $0x28] sm:$0xf]
        %v378 = vld [vmem:[%s307 + $0x2c] sm:$0xf]
        %v379 = vld [vmem:[%s307 + $0x30] sm:$0xf]
        %v380 = vld [vmem:[%s307 + $0x34] sm:$0xf]
        %v381 = vld [vmem:[%s307 + $0x38] sm:$0xf]
        %v382 = vld [vmem:[%s307 + $0x3c] sm:$0xf]
        %v399 = vunpack.c.l.b16 %v351
        %v400 = vunpack.c.l.b16 %v352
        %v401 = vunpack.c.l.b16 %v353
        %v402 = vunpack.c.l.b16 %v354
        %v403 = vunpack.c.l.b16 %v355
        %v404 = vunpack.c.l.b16 %v356
        %v405 = vunpack.c.l.b16 %v357
        %v406 = vunpack.c.l.b16 %v358
        %v407 = vunpack.c.l.b16 %v359
        %v408 = vunpack.c.l.b16 %v360
        %v409 = vunpack.c.l.b16 %v361
        %v410 = vunpack.c.l.b16 %v362
        %v411 = vunpack.c.l.b16 %v363
        %v412 = vunpack.c.l.b16 %v364
        %v413 = vunpack.c.l.b16 %v365
        %v414 = vunpack.c.l.b16 %v366
        %v415 = vpack.c.b16 %v400, %v399
        %v416 = vpack.c.b16 %v402, %v401
        %v417 = vpack.c.b16 %v404, %v403
        %v418 = vpack.c.b16 %v406, %v405
        %v419 = vpack.c.b16 %v408, %v407
        %v420 = vpack.c.b16 %v410, %v409
        %v421 = vpack.c.b16 %v412, %v411
        %v422 = vpack.c.b16 %v414, %v413
        %v447 = vunpack.c.l.b16 %v367
        %v448 = vunpack.c.l.b16 %v368
        %v449 = vunpack.c.l.b16 %v369
        %v450 = vunpack.c.l.b16 %v370
        %v451 = vunpack.c.l.b16 %v371
        %v452 = vunpack.c.l.b16 %v372
        %v453 = vunpack.c.l.b16 %v373
        %v454 = vunpack.c.l.b16 %v374
        %v455 = vunpack.c.l.b16 %v375
        %v456 = vunpack.c.l.b16 %v376
        %v457 = vunpack.c.l.b16 %v377
        %v458 = vunpack.c.l.b16 %v378
        %v459 = vunpack.c.l.b16 %v379
        %v460 = vunpack.c.l.b16 %v380
        %v461 = vunpack.c.l.b16 %v381
        %v462 = vunpack.c.l.b16 %v382
        %v463 = vpack.c.b16 %v448, %v447
        %v464 = vpack.c.b16 %v450, %v449
        %v465 = vpack.c.b16 %v452, %v451
        %v466 = vpack.c.b16 %v454, %v453
        %v467 = vpack.c.b16 %v456, %v455
        %v468 = vpack.c.b16 %v458, %v457
        %v469 = vpack.c.b16 %v460, %v459
        %v470 = vpack.c.b16 %v462, %v461
        %479 = vmatpush.bf16.msra.mxu0 %v470
        %480 = vmatpush.bf16.msra.mxu0 %v469
        %481 = vmatpush.bf16.msra.mxu0 %v468
        %482 = vmatpush.bf16.msra.mxu0 %v467
        %483 = vmatpush.bf16.msra.mxu0 %v466
        %484 = vmatpush.bf16.msra.mxu0 %v465
        %485 = vmatpush.bf16.msra.mxu0 %v464
        %486 = vmatpush.bf16.msra.mxu0 %v463
        %487 = vmatmul.bf16.gmra.mxu0 %v415
        %v488 = vpop.f32.mrf.mxu0
        %v489 = vadd.f32 0.0, %v488
        %v490 = vpop.f32.mrf.mxu0
        %v491 = vadd.f32 0.0, %v490
        %492 = vmatmul.bf16.gmra.mxu0 %v416
        %v493 = vpop.f32.mrf.mxu0
        %v494 = vadd.f32 0.0, %v493
        %v495 = vpop.f32.mrf.mxu0
        %v496 = vadd.f32 0.0, %v495
        %497 = vmatmul.bf16.gmra.mxu0 %v417
        %v498 = vpop.f32.mrf.mxu0
        %v499 = vadd.f32 0.0, %v498
        %v500 = vpop.f32.mrf.mxu0
        %v501 = vadd.f32 0.0, %v500
        %502 = vmatmul.bf16.gmra.mxu0 %v418
        %v503 = vpop.f32.mrf.mxu0
        %v504 = vadd.f32 0.0, %v503
        %v505 = vpop.f32.mrf.mxu0
        %v506 = vadd.f32 0.0, %v505
        %507 = vmatmul.bf16.gmra.mxu0 %v419
        %v508 = vpop.f32.mrf.mxu0
        %v509 = vadd.f32 0.0, %v508
        %v510 = vpop.f32.mrf.mxu0
        %v511 = vadd.f32 0.0, %v510
        %512 = vmatmul.bf16.gmra.mxu0 %v420
        %v513 = vpop.f32.mrf.mxu0
        %v514 = vadd.f32 0.0, %v513
        %v515 = vpop.f32.mrf.mxu0
        %v516 = vadd.f32 0.0, %v515
        %517 = vmatmul.bf16.gmra.mxu0 %v421
        %v518 = vpop.f32.mrf.mxu0
        %v519 = vadd.f32 0.0, %v518
        %v520 = vpop.f32.mrf.mxu0
        %v521 = vadd.f32 0.0, %v520
        %522 = vmatmul.bf16.gmra.mxu0 %v422
        %v523 = vpop.f32.mrf.mxu0
        %v524 = vadd.f32 0.0, %v523
        %v525 = vpop.f32.mrf.mxu0
        %v526 = vadd.f32 0.0, %v525
        %527 = vdwg.mxu0
        %v528 = vadd.f32 %v335, %v489
        %v529 = vadd.f32 %v336, %v491
        %v530 = vadd.f32 %v337, %v494
        %v531 = vadd.f32 %v338, %v496
        %v532 = vadd.f32 %v339, %v499
        %v533 = vadd.f32 %v340, %v501
        %v534 = vadd.f32 %v341, %v504
        %v535 = vadd.f32 %v342, %v506
        %v536 = vadd.f32 %v343, %v509
        %v537 = vadd.f32 %v344, %v511
        %v538 = vadd.f32 %v345, %v514
        %v539 = vadd.f32 %v346, %v516
        %v540 = vadd.f32 %v347, %v519
        %v541 = vadd.f32 %v348, %v521
        %v542 = vadd.f32 %v349, %v524
        %v543 = vadd.f32 %v350, %v526
        %544 = vst [vmem:[#allocation2] sm:$0xff] %v528
        %545 = vst [vmem:[#allocation2 + $0x8] sm:$0xff] %v529
        %546 = vst [vmem:[#allocation2 + $0x10] sm:$0xff] %v530
        %547 = vst [vmem:[#allocation2 + $0x18] sm:$0xff] %v531
        %548 = vst [vmem:[#allocation2 + $0x20] sm:$0xff] %v532
        %549 = vst [vmem:[#allocation2 + $0x28] sm:$0xff] %v533
        %550 = vst [vmem:[#allocation2 + $0x30] sm:$0xff] %v534
        %551 = vst [vmem:[#allocation2 + $0x38] sm:$0xff] %v535
        %552 = vst [vmem:[#allocation2 + $0x40] sm:$0xff] %v536
        %553 = vst [vmem:[#allocation2 + $0x48] sm:$0xff] %v537
        %554 = vst [vmem:[#allocation2 + $0x50] sm:$0xff] %v538
        %555 = vst [vmem:[#allocation2 + $0x58] sm:$0xff] %v539
        %556 = vst [vmem:[#allocation2 + $0x60] sm:$0xff] %v540
        %557 = vst [vmem:[#allocation2 + $0x68] sm:$0xff] %v541
        %558 = vst [vmem:[#allocation2 + $0x70] sm:$0xff] %v542
        %559 = vst [vmem:[#allocation2 + $0x78] sm:$0xff] %v543
        %p560 = scmp.eq.s32.totalorder %s19, 1
        // Predicated region
        $region78: #{encoder_forward.3} parent=68 // pred_check
          %p561 = pneg %p560
        $region79: #{encoder_forward.3} parent=68 // pred_check_branch
          %563 = sbr.rel (%p561) target = $region81
        $region80: #{encoder_forward.3} parent=68 // pred_region
          %v564 = vld [vmem:[#allocation2] sm:$0xff]
          %v565 = vld [vmem:[#allocation2 + $0x8] sm:$0xff]
          %v566 = vld [vmem:[#allocation2 + $0x10] sm:$0xff]
          %v567 = vld [vmem:[#allocation2 + $0x18] sm:$0xff]
          %v568 = vld [vmem:[#allocation2 + $0x20] sm:$0xff]
          %v569 = vld [vmem:[#allocation2 + $0x28] sm:$0xff]
          %v570 = vld [vmem:[#allocation2 + $0x30] sm:$0xff]
          %v571 = vld [vmem:[#allocation2 + $0x38] sm:$0xff]
          %v572 = vld [vmem:[#allocation2 + $0x40] sm:$0xff]
          %v573 = vld [vmem:[#allocation2 + $0x48] sm:$0xff]
          %v574 = vld [vmem:[#allocation2 + $0x50] sm:$0xff]
          %v575 = vld [vmem:[#allocation2 + $0x58] sm:$0xff]
          %v576 = vld [vmem:[#allocation2 + $0x60] sm:$0xff]
          %v577 = vld [vmem:[#allocation2 + $0x68] sm:$0xff]
          %v578 = vld [vmem:[#allocation2 + $0x70] sm:$0xff]
          %v579 = vld [vmem:[#allocation2 + $0x78] sm:$0xff]
          %v580 = vld [vmem:[%s2] sm:$0x1]
          %v582 = vperm.slane %v580, 0
          %v584 = vadd.f32 %v564, %v582
          %v585 = vadd.f32 %v565, %v582
          %v586 = vadd.f32 %v566, %v582
          %v587 = vadd.f32 %v567, %v582
          %v588 = vadd.f32 %v568, %v582
          %v589 = vadd.f32 %v569, %v582
          %v590 = vadd.f32 %v570, %v582
          %v591 = vadd.f32 %v571, %v582
          %v592 = vadd.f32 %v572, %v582
          %v593 = vadd.f32 %v573, %v582
          %v594 = vadd.f32 %v574, %v582
          %v595 = vadd.f32 %v575, %v582
          %v596 = vadd.f32 %v576, %v582
          %v597 = vadd.f32 %v577, %v582
          %v598 = vadd.f32 %v578, %v582
          %v599 = vadd.f32 %v579, %v582
          %600 = vst [vmem:[%s313] sm:$0xff] %v584
          %601 = vst [vmem:[%s313 + $0x8] sm:$0xff] %v585
          %602 = vst [vmem:[%s313 + $0x10] sm:$0xff] %v586
          %603 = vst [vmem:[%s313 + $0x18] sm:$0xff] %v587
          %604 = vst [vmem:[%s313 + $0x20] sm:$0xff] %v588
          %605 = vst [vmem:[%s313 + $0x28] sm:$0xff] %v589
          %606 = vst [vmem:[%s313 + $0x30] sm:$0xff] %v590
          %607 = vst [vmem:[%s313 + $0x38] sm:$0xff] %v591
          %608 = vst [vmem:[%s313 + $0x40] sm:$0xff] %v592
          %609 = vst [vmem:[%s313 + $0x48] sm:$0xff] %v593
          %610 = vst [vmem:[%s313 + $0x50] sm:$0xff] %v594
          %611 = vst [vmem:[%s313 + $0x58] sm:$0xff] %v595
          %612 = vst [vmem:[%s313 + $0x60] sm:$0xff] %v596
          %613 = vst [vmem:[%s313 + $0x68] sm:$0xff] %v597
          %614 = vst [vmem:[%s313 + $0x70] sm:$0xff] %v598
          %615 = vst [vmem:[%s313 + $0x78] sm:$0xff] %v599
        $region81: #{encoder_forward.3} parent=68 // pred_fallthru
          _
        %s616 = smul.u32 16, %s18
        %p617 = scmp.lt.s32.totalorder %s616, 31
        %s618 = scalar_select %p617, %s616, 31
        %s619 = smul.addr %s618, 8
        %s620 = scalar_lea.vmem %s3, %s619
        // Predicated region
        $region82: #{encoder_forward.3} parent=68 // pred_check
          %p621 = pneg %p119
        $region83: #{encoder_forward.3} parent=68 // pred_check_branch
          %623 = sbr.rel (%p621) target = $region85
        $region84: #{encoder_forward.3} parent=68 // pred_region
          %s624 = smul.u32 16, %s18
        $region85: #{encoder_forward.3} parent=68 // pred_fallthru
          _
      $region69: #{encoder_forward.3} parent=5 // pred_fallthru
        _
      %p625 = scmp.le.s32.totalorder 2, %s9
      // Predicated region
      $region86: #{encoder_forward.3} parent=5 // pred_check
        %p626 = pneg %p625
      $region87: #{encoder_forward.3} parent=5 // pred_check_branch
        %628 = sbr.rel (%p626) target = $region89
      $region88: #{encoder_forward.3} parent=5 // pred_region
        %s629 = ssub.s32 %s9, 2
        // Predicated region
        $region90: #{encoder_forward.3} parent=88 // pred_check
          %p630 = pneg %p125
        $region91: #{encoder_forward.3} parent=88 // pred_check_branch
          %632 = sbr.rel (%p630) target = $region93
        $region92: #{encoder_forward.3} parent=88 // pred_region
          %s633 = smul.u32 16, %s20
          %p634 = scmp.lt.s32.totalorder %s633, 31
          %s635 = scalar_select %p634, %s633, 31
          %s636 = smul.addr %s635, 8
          %s637 = scalar_lea.vmem %s3, %s636
        $region93: #{encoder_forward.3} parent=88 // pred_fallthru
          _
      $region89: #{encoder_forward.3} parent=5 // pred_fallthru
        _
    $region6: #{encoder_forward.3} parent=1 // loop_footer
      %s13 = sadd.s32 1, %s9
    $region7: #{encoder_forward.3} parent=1 // loop_footer_branch
      %8 = sbr.rel target = $region3
    $region8: #{encoder_forward.3} parent=1 // loop_exit
      _

// kernel: encoder_forward.2
$region0: #{encoder_forward.2}
  #allocation0 [shape = 'u32[]', space=smem, size = 0x4, offset = 0x4, fixed_abs, tag = 'smem constant byte address 0x4 - core index']
  #allocation1 [shape = 'u32[72,128]{1,0:T(1,128)}', space=vmem, size = 0x9000, scoped, tag = 'internal scratch']
  #allocation2 [shape = 'f32[128,128]{1,0:T(8,128)}', space=vmem, size = 0x10000, scoped, tag = 'scratch operand']
  %s0 = inlined_call_operand.vmem [shape: bf16[256,256], index: 0, kind: input, shape index: {}]
  %s1 = inlined_call_operand.vmem [shape: bf16[256,128], index: 1, kind: input, shape index: {}]
  %s2 = inlined_call_operand.vmem [shape: f32[128,128], index: 2, kind: input, shape index: {}]
  %s3 = inlined_call_operand.vmem [shape: f32[1,128], index: 3, kind: input, shape index: {}]
  %s4 = inlined_call_operand.vmem [shape: f32[128,128], index: 4, kind: input, shape index: {}]
  %s5 = inlined_call_operand.vmem [shape: bf16[256,128], index: 5, kind: output, shape index: {}]
  %s6 = sld [smem:[#allocation0]]
  $region102: #{encoder_forward.2} parent=0
    _
  %s8 = ssub.s32 1, %s6
  %s9 = scalar_select 0, %s8, %s6
  $region1: #{encoder_forward.2} parent=0
    #allocation3 [shape = 'u8[65536]{0}', space=vmem, size = 0x10000, scoped, tag = 'input window, operand 0']
    loop: start=0, step=1, limit=6
    $region2: #{encoder_forward.2} parent=1 // loop_pre_header
      _
    $region3: #{encoder_forward.2} parent=1 // loop_header
      %s11 = sphi 0, %s15
      %p12 = scmp.ge.s32.totalorder %s11, 6
      %s18 = sphi 0, %s30
      %s19 = sphi 0, %s26
      %s20 = sphi 0, %s18
      %s21 = sphi 0, %s19
      %s22 = sphi 0, %s20
      %s23 = sphi 0, %s21
      %s35 = sphi 0, %s37
      %s38 = sphi 0, %s35
      %s39 = sphi 0, %s38
      %s55 = sphi 0, %s39
      %s61 = sphi 0, %s63
      %s64 = sphi 0, %s61
      %s65 = sphi 0, %s64
      %s81 = sphi 0, %s65
      %s85 = sphi 0, %s85
      %s87 = sphi 0, %s85
      %s88 = sphi 0, %s87
      %s102 = sphi 0, %s88
      %s106 = sphi 0, %s106
      %s108 = sphi 0, %s106
      %s109 = sphi 0, %s108
      %s123 = sphi 0, %s109
      %s127 = sphi 0, %s127
      %s129 = sphi 0, %s127
      %s130 = sphi 0, %s129
      %s144 = sphi 0, %s130
      %s150 = sphi 0, %s152
      %s153 = sphi 0, %s150
      %s154 = sphi 0, %s153
      %s170 = sphi 0, %s154
    $region4: #{encoder_forward.2} parent=1 // loop_header_branch
      %14 = sbr.rel (%p12) target = $region8
    $region5: #{encoder_forward.2} parent=1 // loop_body
      %s16 = ssub.s32 %s11, 1
      %s17 = ssub.s32 %s11, 2
      %s24 = sadd.s32 1, %s19
      %p25 = scmp.ge.s32.totalorder %s24, 2
      %s26 = scalar_select %p25, 0, %s24
      %s27 = sadd.s32 1, %s18
      %s28 = scalar_select %p25, %s27, %s18
      %p29 = scmp.ge.s32.totalorder %s28, 2
      %s30 = scalar_select %p29, 0, %s28
      %s31 = ssub.s32 %s18, %s30
      %s32 = ssub.s32 %s19, %s26
      %s33 = sor.u32 %s31, %s32
      %p34 = scmp.eq.s32.totalorder %s33, 0
      %s36 = sadd.s32 %s35, 1
      %s37 = scalar_select %p34, %s35, %s36
      %p40 = pneg %p34
      %p41 = scmp.eq.s32.totalorder %s11, 3
      %p42 = por %p40, %p41
      %p43 = scmp.ne.s32.totalorder %s35, %s38
      %p44 = scmp.eq.s32.totalorder %s11, 0
      %p45 = por %p43, %p44
      %p46 = scmp.ne.s32.totalorder %s35, %s38
      %p47 = scmp.eq.s32.totalorder %s16, 3
      %p48 = por %p46, %p47
      %p49 = scmp.ne.s32.totalorder %s38, %s39
      %p50 = scmp.eq.s32.totalorder %s16, 0
      %p51 = por %p49, %p50
      %p52 = scmp.ne.s32.totalorder %s38, %s39
      %p53 = scmp.eq.s32.totalorder %s17, 3
      %p54 = por %p52, %p53
      %p56 = scmp.ne.s32.totalorder %s39, %s55
      %p57 = scmp.eq.s32.totalorder %s17, 0
      %p58 = por %p56, %p57
      %s59 = ssub.s32 %s19, %s26
      %p60 = scmp.eq.s32.totalorder %s59, 0
      %s62 = sadd.s32 %s61, 1
      %s63 = scalar_select %p60, %s61, %s62
      %p66 = pneg %p60
      %p67 = scmp.eq.s32.totalorder %s11, 3
      %p68 = por %p66, %p67
      %p69 = scmp.ne.s32.totalorder %s61, %s64
      %p70 = scmp.eq.s32.totalorder %s11, 0
      %p71 = por %p69, %p70
      %p72 = scmp.ne.s32.totalorder %s61, %s64
      %p73 = scmp.eq.s32.totalorder %s16, 3
      %p74 = por %p72, %p73
      %p75 = scmp.ne.s32.totalorder %s64, %s65
      %p76 = scmp.eq.s32.totalorder %s16, 0
      %p77 = por %p75, %p76
      %p78 = scmp.ne.s32.totalorder %s64, %s65
      %p79 = scmp.eq.s32.totalorder %s17, 3
      %p80 = por %p78, %p79
      %p82 = scmp.ne.s32.totalorder %s65, %s81
      %p83 = scmp.eq.s32.totalorder %s17, 0
      %p84 = por %p82, %p83
      %s86 = sadd.s32 %s85, 1
      %p89 = scmp.eq.s32.totalorder %s11, 3
      %p90 = scmp.ne.s32.totalorder %s85, %s87
      %p91 = scmp.eq.s32.totalorder %s11, 0
      %p92 = por %p90, %p91
      %p93 = scmp.ne.s32.totalorder %s85, %s87
      %p94 = scmp.eq.s32.totalorder %s16, 3
      %p95 = por %p93, %p94
      %p96 = scmp.ne.s32.totalorder %s87, %s88
      %p97 = scmp.eq.s32.totalorder %s16, 0
      %p98 = por %p96, %p97
      %p99 = scmp.ne.s32.totalorder %s87, %s88
      %p100 = scmp.eq.s32.totalorder %s17, 3
      %p101 = por %p99, %p100
      %p103 = scmp.ne.s32.totalorder %s88, %s102
      %p104 = scmp.eq.s32.totalorder %s17, 0
      %p105 = por %p103, %p104
      %s107 = sadd.s32 %s106, 1
      %p110 = scmp.eq.s32.totalorder %s11, 3
      %p111 = scmp.ne.s32.totalorder %s106, %s108
      %p112 = scmp.eq.s32.totalorder %s11, 0
      %p113 = por %p111, %p112
      %p114 = scmp.ne.s32.totalorder %s106, %s108
      %p115 = scmp.eq.s32.totalorder %s16, 3
      %p116 = por %p114, %p115
      %p117 = scmp.ne.s32.totalorder %s108, %s109
      %p118 = scmp.eq.s32.totalorder %s16, 0
      %p119 = por %p117, %p118
      %p120 = scmp.ne.s32.totalorder %s108, %s109
      %p121 = scmp.eq.s32.totalorder %s17, 3
      %p122 = por %p120, %p121
      %p124 = scmp.ne.s32.totalorder %s109, %s123
      %p125 = scmp.eq.s32.totalorder %s17, 0
      %p126 = por %p124, %p125
      %s128 = sadd.s32 %s127, 1
      %p131 = scmp.eq.s32.totalorder %s11, 3
      %p132 = scmp.ne.s32.totalorder %s127, %s129
      %p133 = scmp.eq.s32.totalorder %s11, 0
      %p134 = por %p132, %p133
      %p135 = scmp.ne.s32.totalorder %s127, %s129
      %p136 = scmp.eq.s32.totalorder %s16, 3
      %p137 = por %p135, %p136
      %p138 = scmp.ne.s32.totalorder %s129, %s130
      %p139 = scmp.eq.s32.totalorder %s16, 0
      %p140 = por %p138, %p139
      %p141 = scmp.ne.s32.totalorder %s129, %s130
      %p142 = scmp.eq.s32.totalorder %s17, 3
      %p143 = por %p141, %p142
      %p145 = scmp.ne.s32.totalorder %s130, %s144
      %p146 = scmp.eq.s32.totalorder %s17, 0
      %p147 = por %p145, %p146
      %s148 = ssub.s32 %s18, %s30
      %p149 = scmp.eq.s32.totalorder %s148, 0
      %s151 = sadd.s32 %s150, 1
      %s152 = scalar_select %p149, %s150, %s151
      %p155 = pneg %p149
      %p156 = scmp.eq.s32.totalorder %s11, 3
      %p157 = por %p155, %p156
      %p158 = scmp.ne.s32.totalorder %s150, %s153
      %p159 = scmp.eq.s32.totalorder %s11, 0
      %p160 = por %p158, %p159
      %p161 = scmp.ne.s32.totalorder %s150, %s153
      %p162 = scmp.eq.s32.totalorder %s16, 3
      %p163 = por %p161, %p162
      %p164 = scmp.ne.s32.totalorder %s153, %s154
      %p165 = scmp.eq.s32.totalorder %s16, 0
      %p166 = por %p164, %p165
      %p167 = scmp.ne.s32.totalorder %s153, %s154
      %p168 = scmp.eq.s32.totalorder %s17, 3
      %p169 = por %p167, %p168
      %p171 = scmp.ne.s32.totalorder %s154, %s170
      %p172 = scmp.eq.s32.totalorder %s17, 0
      %p173 = por %p171, %p172
      %p174 = scmp.le.s32.totalorder 1, %s11
      %p175 = scmp.lt.s32.totalorder %s11, 5
      %p176 = pnand %p174, %p175
      %p177 = pneg %p176
      // Predicated region
      $region9: #{encoder_forward.2} parent=5 // pred_check
        _
      $region10: #{encoder_forward.2} parent=5 // pred_check_branch
        %179 = sbr.rel (%p176) target = $region12
      $region11: #{encoder_forward.2} parent=5 // pred_region
        %s180 = ssub.s32 %s11, 1
        // Predicated region
        $region13: #{encoder_forward.2} parent=11 // pred_check
          %p181 = pneg %p98
        $region14: #{encoder_forward.2} parent=11 // pred_check_branch
          %183 = sbr.rel (%p181) target = $region16
        $region15: #{encoder_forward.2} parent=11 // pred_region
          _
        $region16: #{encoder_forward.2} parent=11 // pred_fallthru
          _
        // Predicated region
        $region17: #{encoder_forward.2} parent=11 // pred_check
          %p184 = pneg %p119
        $region18: #{encoder_forward.2} parent=11 // pred_check_branch
          %186 = sbr.rel (%p184) target = $region20
        $region19: #{encoder_forward.2} parent=11 // pred_region
          _
        $region20: #{encoder_forward.2} parent=11 // pred_fallthru
          _
        // Predicated region
        $region21: #{encoder_forward.2} parent=11 // pred_check
          %p187 = pneg %p140
        $region22: #{encoder_forward.2} parent=11 // pred_check_branch
          %189 = sbr.rel (%p187) target = $region24
        $region23: #{encoder_forward.2} parent=11 // pred_region
          _
        $region24: #{encoder_forward.2} parent=11 // pred_fallthru
          _
      $region12: #{encoder_forward.2} parent=5 // pred_fallthru
        _
      %p190 = scmp.lt.s32.totalorder %s11, 4
      // Predicated region
      $region25: #{encoder_forward.2} parent=5 // pred_check
        %p191 = pneg %p190
      $region26: #{encoder_forward.2} parent=5 // pred_check_branch
        %193 = sbr.rel (%p191) target = $region28
      $region27: #{encoder_forward.2} parent=5 // pred_region
        // Predicated region
        $region29: #{encoder_forward.2} parent=27 // pred_check
          %p194 = pneg %p45
        $region30: #{encoder_forward.2} parent=27 // pred_check_branch
          %196 = sbr.rel (%p194) target = $region32
        $region31: #{encoder_forward.2} parent=27 // pred_region
          %s197 = sand.u32 %s35, 1
          %s198 = sand.u32 %s35, 1
          %s199 = smul.addr %s198, 64
          %s200 = scalar_lea.vmem [#allocation3], %s199
          %s201 = smul.u32 16, %s18
          %s202 = smul.addr %s201, 2
          %s203 = sadd.s32 %s19, %s202
          %s204 = smul.addr %s203, 4
          %s205 = scalar_lea.vmem %s0, %s204
          // Predicated region
          $region33: #{encoder_forward.2} parent=31 // pred_check
            _
          $region34: #{encoder_forward.2} parent=31 // pred_check_branch
            %207 = sbr.rel (0) target = $region36
          $region35: #{encoder_forward.2} parent=31 // pred_region
            // Predicated region
            $region37: #{encoder_forward.2} parent=35 // pred_check
              _
            $region38: #{encoder_forward.2} parent=35 // pred_check_branch
              %209 = sbr.rel target = $region40
            $region39: #{encoder_forward.2} parent=35 // pred_region
              // Predicated region
              $region52: #{encoder_forward.2} parent=39 // pred_check
                _
              $region53: #{encoder_forward.2} parent=39 // pred_check_branch
                %255 = sbr.rel (0) target = $region55
              $region54: #{encoder_forward.2} parent=39 // pred_region
                loop: start=0, step=1, limit=1
                $region56: #{encoder_forward.2} parent=54 // loop_pre_header
                  _
                $region57: #{encoder_forward.2} parent=54 // loop_header
                  %s257 = sphi 0, %s261
                  %p258 = scmp.ge.s32.totalorder %s257, 1
                  %s262 = sphi %s205, %s205
                  %s263 = sphi %s200, %s200
                $region58: #{encoder_forward.2} parent=54 // loop_header_branch
                  %260 = sbr.rel (%p258) target = $region62
                $region59: #{encoder_forward.2} parent=54 // loop_body
                  _
                $region60: #{encoder_forward.2} parent=54 // loop_footer
                  %s261 = sadd.s32 1, %s257
                $region61: #{encoder_forward.2} parent=54 // loop_footer_branch
                  %256 = sbr.rel target = $region57
                $region62: #{encoder_forward.2} parent=54 // loop_exit
                  _
                %s265 = ssub.s32 16, 1
                loop: start=0, step=1, limit=1
                $region63: #{encoder_forward.2} parent=54 // loop_pre_header
                  _
                $region64: #{encoder_forward.2} parent=54 // loop_header
                  %s267 = sphi 0, %s271
                  %p268 = scmp.ge.s32.totalorder %s267, 1
                  %s272 = sphi %s205, %s205
                  %s273 = sphi %s200, %s200
                $region65: #{encoder_forward.2} parent=54 // loop_header_branch
                  %270 = sbr.rel (%p268) target = $region69
                $region66: #{encoder_forward.2} parent=54 // loop_body
                  %v274 = vld [vmem:[%s272] sm:%s265]
                  %275 = vst [vmem:[%s273] sm:%s265] %v274
                  %v276 = vld [vmem:[%s272 + $0x8] sm:%s265]
                  %277 = vst [vmem:[%s273 + $0x4] sm:%s265] %v276
                  %v278 = vld [vmem:[%s272 + $0x10] sm:%s265]
                  %279 = vst [vmem:[%s273 + $0x8] sm:%s265] %v278
                  %v280 = vld [vmem:[%s272 + $0x18] sm:%s265]
                  %281 = vst [vmem:[%s273 + $0xc] sm:%s265] %v280
                  %v282 = vld [vmem:[%s272 + $0x20] sm:%s265]
                  %283 = vst [vmem:[%s273 + $0x10] sm:%s265] %v282
                  %v284 = vld [vmem:[%s272 + $0x28] sm:%s265]
                  %285 = vst [vmem:[%s273 + $0x14] sm:%s265] %v284
                  %v286 = vld [vmem:[%s272 + $0x30] sm:%s265]
                  %287 = vst [vmem:[%s273 + $0x18] sm:%s265] %v286
                  %v288 = vld [vmem:[%s272 + $0x38] sm:%s265]
                  %289 = vst [vmem:[%s273 + $0x1c] sm:%s265] %v288
                  %v290 = vld [vmem:[%s272 + $0x40] sm:%s265]
                  %291 = vst [vmem:[%s273 + $0x20] sm:%s265] %v290
                  %v292 = vld [vmem:[%s272 + $0x48] sm:%s265]
                  %293 = vst [vmem:[%s273 + $0x24] sm:%s265] %v292
                  %v294 = vld [vmem:[%s272 + $0x50] sm:%s265]
                  %295 = vst [vmem:[%s273 + $0x28] sm:%s265] %v294
                  %v296 = vld [vmem:[%s272 + $0x58] sm:%s265]
                  %297 = vst [vmem:[%s273 + $0x2c] sm:%s265] %v296
                  %v298 = vld [vmem:[%s272 + $0x60] sm:%s265]
                  %299 = vst [vmem:[%s273 + $0x30] sm:%s265] %v298
                  %v300 = vld [vmem:[%s272 + $0x68] sm:%s265]
                  %301 = vst [vmem:[%s273 + $0x34] sm:%s265] %v300
                  %v302 = vld [vmem:[%s272 + $0x70] sm:%s265]
                  %303 = vst [vmem:[%s273 + $0x38] sm:%s265] %v302
                  %v304 = vld [vmem:[%s272 + $0x78] sm:%s265]
                  %305 = vst [vmem:[%s273 + $0x3c] sm:%s265] %v304
                $region67: #{encoder_forward.2} parent=54 // loop_footer
                  %s271 = sadd.s32 1, %s267
                $region68: #{encoder_forward.2} parent=54 // loop_footer_branch
                  %266 = sbr.rel target = $region64
                $region69: #{encoder_forward.2} parent=54 // loop_exit
                  _
              $region55: #{encoder_forward.2} parent=39 // pred_fallthru
                _
            $region40: #{encoder_forward.2} parent=35 // pred_fallthru
              _
            // Predicated region
            $region41: #{encoder_forward.2} parent=35 // pred_check
              _
            $region42: #{encoder_forward.2} parent=35 // pred_check_branch
              %211 = sbr.rel (0) target = $region44
            $region43: #{encoder_forward.2} parent=35 // pred_region
              %s213 = ssub.s32 16, 1
              loop: start=0, step=1, limit=1
              $region45: #{encoder_forward.2} parent=43 // loop_pre_header
                _
              $region46: #{encoder_forward.2} parent=43 // loop_header
                %s215 = sphi 0, %s219
                %p216 = scmp.ge.s32.totalorder %s215, 1
                %s220 = sphi %s205, %s205
                %s221 = sphi %s200, %s200
              $region47: #{encoder_forward.2} parent=43 // loop_header_branch
                %218 = sbr.rel (%p216) target = $region51
              $region48: #{encoder_forward.2} parent=43 // loop_body
                %v222 = vld [vmem:[%s220] sm:%s213]
                %223 = vst [vmem:[%s221] sm:%s213] %v222
                %v224 = vld [vmem:[%s220 + $0x8] sm:%s213]
                %225 = vst [vmem:[%s221 + $0x4] sm:%s213] %v224
                %v226 = vld [vmem:[%s220 + $0x10] sm:%s213]
                %227 = vst [vmem:[%s221 + $0x8] sm:%s213] %v226
                %v228 = vld [vmem:[%s220 + $0x18] sm:%s213]
                %229 = vst [vmem:[%s221 + $0xc] sm:%s213] %v228
                %v230 = vld [vmem:[%s220 + $0x20] sm:%s213]
                %231 = vst [vmem:[%s221 + $0x10] sm:%s213] %v230
                %v232 = vld [vmem:[%s220 + $0x28] sm:%s213]
                %233 = vst [vmem:[%s221 + $0x14] sm:%s213] %v232
                %v234 = vld [vmem:[%s220 + $0x30] sm:%s213]
                %235 = vst [vmem:[%s221 + $0x18] sm:%s213] %v234
                %v236 = vld [vmem:[%s220 + $0x38] sm:%s213]
                %237 = vst [vmem:[%s221 + $0x1c] sm:%s213] %v236
                %v238 = vld [vmem:[%s220 + $0x40] sm:%s213]
                %239 = vst [vmem:[%s221 + $0x20] sm:%s213] %v238
                %v240 = vld [vmem:[%s220 + $0x48] sm:%s213]
                %241 = vst [vmem:[%s221 + $0x24] sm:%s213] %v240
                %v242 = vld [vmem:[%s220 + $0x50] sm:%s213]
                %243 = vst [vmem:[%s221 + $0x28] sm:%s213] %v242
                %v244 = vld [vmem:[%s220 + $0x58] sm:%s213]
                %245 = vst [vmem:[%s221 + $0x2c] sm:%s213] %v244
                %v246 = vld [vmem:[%s220 + $0x60] sm:%s213]
                %247 = vst [vmem:[%s221 + $0x30] sm:%s213] %v246
                %v248 = vld [vmem:[%s220 + $0x68] sm:%s213]
                %249 = vst [vmem:[%s221 + $0x34] sm:%s213] %v248
                %v250 = vld [vmem:[%s220 + $0x70] sm:%s213]
                %251 = vst [vmem:[%s221 + $0x38] sm:%s213] %v250
                %v252 = vld [vmem:[%s220 + $0x78] sm:%s213]
                %253 = vst [vmem:[%s221 + $0x3c] sm:%s213] %v252
              $region49: #{encoder_forward.2} parent=43 // loop_footer
                %s219 = sadd.s32 1, %s215
              $region50: #{encoder_forward.2} parent=43 // loop_footer_branch
                %214 = sbr.rel target = $region46
              $region51: #{encoder_forward.2} parent=43 // loop_exit
                _
            $region44: #{encoder_forward.2} parent=35 // pred_fallthru
              _
          $region36: #{encoder_forward.2} parent=31 // pred_fallthru
            _
          %306 = vnop
        $region32: #{encoder_forward.2} parent=27 // pred_fallthru
          _
        // Predicated region
        $region70: #{encoder_forward.2} parent=27 // pred_check
          %p307 = pneg %p71
        $region71: #{encoder_forward.2} parent=27 // pred_check_branch
          %309 = sbr.rel (%p307) target = $region73
        $region72: #{encoder_forward.2} parent=27 // pred_region
          %s310 = smul.u32 16, %s19
          %p311 = scmp.lt.s32.totalorder %s310, 31
          %s312 = scalar_select %p311, %s310, 31
          %s313 = smul.addr %s312, 4
          %s314 = scalar_lea.vmem %s1, %s313
          %s315 = smul.u32 16, %s19
        $region73: #{encoder_forward.2} parent=27 // pred_fallthru
          _
      $region28: #{encoder_forward.2} parent=5 // pred_fallthru
        _
      %p316 = scmp.le.s32.totalorder 1, %s11
      %p317 = scmp.lt.s32.totalorder %s11, 5
      %p318 = pnand %p316, %p317
      %p319 = pneg %p318
      // Predicated region
      $region74: #{encoder_forward.2} parent=5 // pred_check
        _
      $region75: #{encoder_forward.2} parent=5 // pred_check_branch
        %321 = sbr.rel (%p318) target = $region77
      $region76: #{encoder_forward.2} parent=5 // pred_region
        %s322 = ssub.s32 %s11, 1
        %s323 = sand.u32 %s38, 1
        %s324 = sand.u32 %s38, 1
        %s325 = smul.addr %s324, 64
        %s326 = scalar_lea.vmem [#allocation3], %s325
        // Predicated region
        $region78: #{encoder_forward.2} parent=76 // pred_check
          %p327 = pneg %p51
        $region79: #{encoder_forward.2} parent=76 // pred_check_branch
          %329 = sbr.rel (%p327) target = $region81
        $region80: #{encoder_forward.2} parent=76 // pred_region
          _
        $region81: #{encoder_forward.2} parent=76 // pred_fallthru
          _
        %s330 = sand.u32 %s38, 1
        %s331 = sand.u32 %s38, 1
        %s332 = smul.addr %s331, 64
        %s333 = scalar_lea.vmem [#allocation3], %s332
        %p334 = pneg %p51
        %p335 = pneg %p48
        %s336 = smul.u32 16, %s21
        %p337 = scmp.lt.s32.totalorder %s336, 31
        %s338 = scalar_select %p337, %s336, 31
        %s339 = smul.addr %s338, 4
        %s340 = scalar_lea.vmem %s1, %s339
        %p341 = pneg %p77
        %p342 = pneg %p74
        %p343 = pneg %p98
        %p344 = pneg %p95
        %p345 = pneg %p119
        %p346 = pneg %p116
        %p347 = pneg %p140
        %p348 = pneg %p137
        %p349 = pneg %p166
        %p350 = pneg %p163
        %s351 = smul.u32 16, %s20
        %p352 = scmp.lt.s32.totalorder %s351, 31
        %s353 = scalar_select %p352, %s351, 31
        %s354 = smul.addr %s353, 4
        %s355 = scalar_lea.vmem %s5, %s354
        %s356 = smul.u32 16, %s20
        %s357 = smul.u32 16, %s21
        %p358 = scmp.lt.s32.totalorder %s357, 31
        %s359 = scalar_select %p358, %s357, 31
        %s360 = smul.addr %s359, 4
        %s361 = scalar_lea.vmem %s1, %s360
        %s362 = smul.u32 16, %s21
        %s363 = smul.u32 16, %s20
        %p364 = scmp.lt.s32.totalorder %s363, 31
        %s365 = scalar_select %p364, %s363, 31
        %s366 = smul.addr %s365, 4
        %s367 = scalar_lea.vmem %s5, %s366
        %s368 = smul.u32 16, %s20
        %p369 = scmp.eq.s32.totalorder %s21, 0
        // Predicated region
        $region82: #{encoder_forward.2} parent=76 // pred_check
          %p370 = pneg %p369
        $region83: #{encoder_forward.2} parent=76 // pred_check_branch
          %372 = sbr.rel (%p370) target = $region85
        $region84: #{encoder_forward.2} parent=76 // pred_region
          %373 = vst [vmem:[#allocation2] sm:$0xff] 0.0
          %374 = vst [vmem:[#allocation2 + $0x8] sm:$0xff] 0.0
          %375 = vst [vmem:[#allocation2 + $0x10] sm:$0xff] 0.0
          %376 = vst [vmem:[#allocation2 + $0x18] sm:$0xff] 0.0
          %377 = vst [vmem:[#allocation2 + $0x20] sm:$0xff] 0.0
          %378 = vst [vmem:[#allocation2 + $0x28] sm:$0xff] 0.0
          %379 = vst [vmem:[#allocation2 + $0x30] sm:$0xff] 0.0
          %380 = vst [vmem:[#allocation2 + $0x38] sm:$0xff] 0.0
          %381 = vst [vmem:[#allocation2 + $0x40] sm:$0xff] 0.0
          %382 = vst [vmem:[#allocation2 + $0x48] sm:$0xff] 0.0
          %383 = vst [vmem:[#allocation2 + $0x50] sm:$0xff] 0.0
          %384 = vst [vmem:[#allocation2 + $0x58] sm:$0xff] 0.0
          %385 = vst [vmem:[#allocation2 + $0x60] sm:$0xff] 0.0
          %386 = vst [vmem:[#allocation2 + $0x68] sm:$0xff] 0.0
          %387 = vst [vmem:[#allocation2 + $0x70] sm:$0xff] 0.0
          %388 = vst [vmem:[#allocation2 + $0x78] sm:$0xff] 0.0
        $region85: #{encoder_forward.2} parent=76 // pred_fallthru
          _
        %v389 = vld [vmem:[#allocation2] sm:$0xff]
        %v390 = vld [vmem:[#allocation2 + $0x8] sm:$0xff]
        %v391 = vld [vmem:[#allocation2 + $0x10] sm:$0xff]
        %v392 = vld [vmem:[#allocation2 + $0x18] sm:$0xff]
        %v393 = vld [vmem:[#allocation2 + $0x20] sm:$0xff]
        %v394 = vld [vmem:[#allocation2 + $0x28] sm:$0xff]
        %v395 = vld [vmem:[#allocation2 + $0x30] sm:$0xff]
        %v396 = vld [vmem:[#allocation2 + $0x38] sm:$0xff]
        %v397 = vld [vmem:[#allocation2 + $0x40] sm:$0xff]
        %v398 = vld [vmem:[#allocation2 + $0x48] sm:$0xff]
        %v399 = vld [vmem:[#allocation2 + $0x50] sm:$0xff]
        %v400 = vld [vmem:[#allocation2 + $0x58] sm:$0xff]
        %v401 = vld [vmem:[#allocation2 + $0x60] sm:$0xff]
        %v402 = vld [vmem:[#allocation2 + $0x68] sm:$0xff]
        %v403 = vld [vmem:[#allocation2 + $0x70] sm:$0xff]
        %v404 = vld [vmem:[#allocation2 + $0x78] sm:$0xff]
        %v405 = vld [vmem:[%s326] sm:$0xf]
        %v406 = vld [vmem:[%s326 + $0x4] sm:$0xf]
        %v407 = vld [vmem:[%s326 + $0x8] sm:$0xf]
        %v408 = vld [vmem:[%s326 + $0xc] sm:$0xf]
        %v409 = vld [vmem:[%s326 + $0x10] sm:$0xf]
        %v410 = vld [vmem:[%s326 + $0x14] sm:$0xf]
        %v411 = vld [vmem:[%s326 + $0x18] sm:$0xf]
        %v412 = vld [vmem:[%s326 + $0x1c] sm:$0xf]
        %v413 = vld [vmem:[%s326 + $0x20] sm:$0xf]
        %v414 = vld [vmem:[%s326 + $0x24] sm:$0xf]
        %v415 = vld [vmem:[%s326 + $0x28] sm:$0xf]
        %v416 = vld [vmem:[%s326 + $0x2c] sm:$0xf]
        %v417 = vld [vmem:[%s326 + $0x30] sm:$0xf]
        %v418 = vld [vmem:[%s326 + $0x34] sm:$0xf]
        %v419 = vld [vmem:[%s326 + $0x38] sm:$0xf]
        %v420 = vld [vmem:[%s326 + $0x3c] sm:$0xf]
        %v421 = vld [vmem:[%s361] sm:$0xf]
        %v422 = vld [vmem:[%s361 + $0x4] sm:$0xf]
        %v423 = vld [vmem:[%s361 + $0x8] sm:$0xf]
        %v424 = vld [vmem:[%s361 + $0xc] sm:$0xf]
        %v425 = vld [vmem:[%s361 + $0x10] sm:$0xf]
        %v426 = vld [vmem:[%s361 + $0x14] sm:$0xf]
        %v427 = vld [vmem:[%s361 + $0x18] sm:$0xf]
        %v428 = vld [vmem:[%s361 + $0x1c] sm:$0xf]
        %v429 = vld [vmem:[%s361 + $0x20] sm:$0xf]
        %v430 = vld [vmem:[%s361 + $0x24] sm:$0xf]
        %v431 = vld [vmem:[%s361 + $0x28] sm:$0xf]
        %v432 = vld [vmem:[%s361 + $0x2c] sm:$0xf]
        %v433 = vld [vmem:[%s361 + $0x30] sm:$0xf]
        %v434 = vld [vmem:[%s361 + $0x34] sm:$0xf]
        %v435 = vld [vmem:[%s361 + $0x38] sm:$0xf]
        %v436 = vld [vmem:[%s361 + $0x3c] sm:$0xf]
        %v453 = vunpack.c.l.b16 %v405
        %v454 = vunpack.c.l.b16 %v406
        %v455 = vunpack.c.l.b16 %v407
        %v456 = vunpack.c.l.b16 %v408
        %v457 = vunpack.c.l.b16 %v409
        %v458 = vunpack.c.l.b16 %v410
        %v459 = vunpack.c.l.b16 %v411
        %v460 = vunpack.c.l.b16 %v412
        %v461 = vunpack.c.l.b16 %v413
        %v462 = vunpack.c.l.b16 %v414
        %v463 = vunpack.c.l.b16 %v415
        %v464 = vunpack.c.l.b16 %v416
        %v465 = vunpack.c.l.b16 %v417
        %v466 = vunpack.c.l.b16 %v418
        %v467 = vunpack.c.l.b16 %v419
        %v468 = vunpack.c.l.b16 %v420
        %v469 = vpack.c.b16 %v454, %v453
        %v470 = vpack.c.b16 %v456, %v455
        %v471 = vpack.c.b16 %v458, %v457
        %v472 = vpack.c.b16 %v460, %v459
        %v473 = vpack.c.b16 %v462, %v461
        %v474 = vpack.c.b16 %v464, %v463
        %v475 = vpack.c.b16 %v466, %v465
        %v476 = vpack.c.b16 %v468, %v467
        %v501 = vunpack.c.l.b16 %v421
        %v502 = vunpack.c.l.b16 %v422
        %v503 = vunpack.c.l.b16 %v423
        %v504 = vunpack.c.l.b16 %v424
        %v505 = vunpack.c.l.b16 %v425
        %v506 = vunpack.c.l.b16 %v426
        %v507 = vunpack.c.l.b16 %v427
        %v508 = vunpack.c.l.b16 %v428
        %v509 = vunpack.c.l.b16 %v429
        %v510 = vunpack.c.l.b16 %v430
        %v511 = vunpack.c.l.b16 %v431
        %v512 = vunpack.c.l.b16 %v432
        %v513 = vunpack.c.l.b16 %v433
        %v514 = vunpack.c.l.b16 %v434
        %v515 = vunpack.c.l.b16 %v435
        %v516 = vunpack.c.l.b16 %v436
        %v517 = vpack.c.b16 %v502, %v501
        %v518 = vpack.c.b16 %v504, %v503
        %v519 = vpack.c.b16 %v506, %v505
        %v520 = vpack.c.b16 %v508, %v507
        %v521 = vpack.c.b16 %v510, %v509
        %v522 = vpack.c.b16 %v512, %v511
        %v523 = vpack.c.b16 %v514, %v513
        %v524 = vpack.c.b16 %v516, %v515
        %533 = vmatpush.bf16.msra.mxu0 %v524
        %534 = vmatpush.bf16.msra.mxu0 %v523
        %535 = vmatpush.bf16.msra.mxu0 %v522
        %536 = vmatpush.bf16.msra.mxu0 %v521
        %537 = vmatpush.bf16.msra.mxu0 %v520
        %538 = vmatpush.bf16.msra.mxu0 %v519
        %539 = vmatpush.bf16.msra.mxu0 %v518
        %540 = vmatpush.bf16.msra.mxu0 %v517
        %541 = vmatmul.bf16.gmra.mxu0 %v469
        %v542 = vpop.f32.mrf.mxu0
        %v543 = vadd.f32 0.0, %v542
        %v544 = vpop.f32.mrf.mxu0
        %v545 = vadd.f32 0.0, %v544
        %546 = vmatmul.bf16.gmra.mxu0 %v470
        %v547 = vpop.f32.mrf.mxu0
        %v548 = vadd.f32 0.0, %v547
        %v549 = vpop.f32.mrf.mxu0
        %v550 = vadd.f32 0.0, %v549
        %551 = vmatmul.bf16.gmra.mxu0 %v471
        %v552 = vpop.f32.mrf.mxu0
        %v553 = vadd.f32 0.0, %v552
        %v554 = vpop.f32.mrf.mxu0
        %v555 = vadd.f32 0.0, %v554
        %556 = vmatmul.bf16.gmra.mxu0 %v472
        %v557 = vpop.f32.mrf.mxu0
        %v558 = vadd.f32 0.0, %v557
        %v559 = vpop.f32.mrf.mxu0
        %v560 = vadd.f32 0.0, %v559
        %561 = vmatmul.bf16.gmra.mxu0 %v473
        %v562 = vpop.f32.mrf.mxu0
        %v563 = vadd.f32 0.0, %v562
        %v564 = vpop.f32.mrf.mxu0
        %v565 = vadd.f32 0.0, %v564
        %566 = vmatmul.bf16.gmra.mxu0 %v474
        %v567 = vpop.f32.mrf.mxu0
        %v568 = vadd.f32 0.0, %v567
        %v569 = vpop.f32.mrf.mxu0
        %v570 = vadd.f32 0.0, %v569
        %571 = vmatmul.bf16.gmra.mxu0 %v475
        %v572 = vpop.f32.mrf.mxu0
        %v573 = vadd.f32 0.0, %v572
        %v574 = vpop.f32.mrf.mxu0
        %v575 = vadd.f32 0.0, %v574
        %576 = vmatmul.bf16.gmra.mxu0 %v476
        %v577 = vpop.f32.mrf.mxu0
        %v578 = vadd.f32 0.0, %v577
        %v579 = vpop.f32.mrf.mxu0
        %v580 = vadd.f32 0.0, %v579
        %581 = vdwg.mxu0
        %v582 = vadd.f32 %v389, %v543
        %v583 = vadd.f32 %v390, %v545
        %v584 = vadd.f32 %v391, %v548
        %v585 = vadd.f32 %v392, %v550
        %v586 = vadd.f32 %v393, %v553
        %v587 = vadd.f32 %v394, %v555
        %v588 = vadd.f32 %v395, %v558
        %v589 = vadd.f32 %v396, %v560
        %v590 = vadd.f32 %v397, %v563
        %v591 = vadd.f32 %v398, %v565
        %v592 = vadd.f32 %v399, %v568
        %v593 = vadd.f32 %v400, %v570
        %v594 = vadd.f32 %v401, %v573
        %v595 = vadd.f32 %v402, %v575
        %v596 = vadd.f32 %v403, %v578
        %v597 = vadd.f32 %v404, %v580
        %598 = vst [vmem:[#allocation2] sm:$0xff] %v582
        %599 = vst [vmem:[#allocation2 + $0x8] sm:$0xff] %v583
        %600 = vst [vmem:[#allocation2 + $0x10] sm:$0xff] %v584
        %601 = vst [vmem:[#allocation2 + $0x18] sm:$0xff] %v585
        %602 = vst [vmem:[#allocation2 + $0x20] sm:$0xff] %v586
        %603 = vst [vmem:[#allocation2 + $0x28] sm:$0xff] %v587
        %604 = vst [vmem:[#allocation2 + $0x30] sm:$0xff] %v588
        %605 = vst [vmem:[#allocation2 + $0x38] sm:$0xff] %v589
        %606 = vst [vmem:[#allocation2 + $0x40] sm:$0xff] %v590
        %607 = vst [vmem:[#allocation2 + $0x48] sm:$0xff] %v591
        %608 = vst [vmem:[#allocation2 + $0x50] sm:$0xff] %v592
        %609 = vst [vmem:[#allocation2 + $0x58] sm:$0xff] %v593
        %610 = vst [vmem:[#allocation2 + $0x60] sm:$0xff] %v594
        %611 = vst [vmem:[#allocation2 + $0x68] sm:$0xff] %v595
        %612 = vst [vmem:[#allocation2 + $0x70] sm:$0xff] %v596
        %613 = vst [vmem:[#allocation2 + $0x78] sm:$0xff] %v597
        %p614 = scmp.eq.s32.totalorder %s21, 1
        // Predicated region
        $region86: #{encoder_forward.2} parent=76 // pred_check
          %p615 = pneg %p614
        $region87: #{encoder_forward.2} parent=76 // pred_check_branch
          %617 = sbr.rel (%p615) target = $region89
        $region88: #{encoder_forward.2} parent=76 // pred_region
          %v618 = vld [vmem:[#allocation2] sm:$0xff]
          %v619 = vld [vmem:[#allocation2 + $0x8] sm:$0xff]
          %v620 = vld [vmem:[#allocation2 + $0x10] sm:$0xff]
          %v621 = vld [vmem:[#allocation2 + $0x18] sm:$0xff]
          %v622 = vld [vmem:[#allocation2 + $0x20] sm:$0xff]
          %v623 = vld [vmem:[#allocation2 + $0x28] sm:$0xff]
          %v624 = vld [vmem:[#allocation2 + $0x30] sm:$0xff]
          %v625 = vld [vmem:[#allocation2 + $0x38] sm:$0xff]
          %v626 = vld [vmem:[#allocation2 + $0x40] sm:$0xff]
          %v627 = vld [vmem:[#allocation2 + $0x48] sm:$0xff]
          %v628 = vld [vmem:[#allocation2 + $0x50] sm:$0xff]
          %v629 = vld [vmem:[#allocation2 + $0x58] sm:$0xff]
          %v630 = vld [vmem:[#allocation2 + $0x60] sm:$0xff]
          %v631 = vld [vmem:[#allocation2 + $0x68] sm:$0xff]
          %v632 = vld [vmem:[#allocation2 + $0x70] sm:$0xff]
          %v633 = vld [vmem:[#allocation2 + $0x78] sm:$0xff]
          %v634 = vld [vmem:[%s2] sm:$0xff]
          %v635 = vld [vmem:[%s2 + $0x8] sm:$0xff]
          %v636 = vld [vmem:[%s2 + $0x10] sm:$0xff]
          %v637 = vld [vmem:[%s2 + $0x18] sm:$0xff]
          %v638 = vld [vmem:[%s2 + $0x20] sm:$0xff]
          %v639 = vld [vmem:[%s2 + $0x28] sm:$0xff]
          %v640 = vld [vmem:[%s2 + $0x30] sm:$0xff]
          %v641 = vld [vmem:[%s2 + $0x38] sm:$0xff]
          %v642 = vld [vmem:[%s2 + $0x40] sm:$0xff]
          %v643 = vld [vmem:[%s2 + $0x48] sm:$0xff]
          %v644 = vld [vmem:[%s2 + $0x50] sm:$0xff]
          %v645 = vld [vmem:[%s2 + $0x58] sm:$0xff]
          %v646 = vld [vmem:[%s2 + $0x60] sm:$0xff]
          %v647 = vld [vmem:[%s2 + $0x68] sm:$0xff]
          %v648 = vld [vmem:[%s2 + $0x70] sm:$0xff]
          %v649 = vld [vmem:[%s2 + $0x78] sm:$0xff]
          %v650 = vld [vmem:[%s3] sm:$0x1]
          %v652 = vperm.slane %v650, 0
          %654 = vmatpush.msra.mxu0 %v649
          %655 = vmatpush.msra.mxu0 %v648
          %656 = vmatpush.msra.mxu0 %v647
          %657 = vmatpush.msra.mxu0 %v646
          %658 = vmatpush.msra.mxu0 %v645
          %659 = vmatpush.msra.mxu0 %v644
          %660 = vmatpush.msra.mxu0 %v643
          %661 = vmatpush.msra.mxu0 %v642
          %662 = vmatpush.msra.mxu0 %v641
          %663 = vmatpush.msra.mxu0 %v640
          %664 = vmatpush.msra.mxu0 %v639
          %665 = vmatpush.msra.mxu0 %v638
          %666 = vmatpush.msra.mxu0 %v637
          %667 = vmatpush.msra.mxu0 %v636
          %668 = vmatpush.msra.mxu0 %v635
          %669 = vmatpush.msra.mxu0 %v634
          %670 = vmatmul.f32.gmra.mxu0 %v618
          %v671 = vpop.f32.mrf.mxu0
          %v672 = vadd.f32 %v652, %v671
          %673 = vmatmul.f32.gmra.mxu0 %v619
          %v674 = vpop.f32.mrf.mxu0
          %v675 = vadd.f32 %v652, %v674
          %676 = vmatmul.f32.gmra.mxu0 %v620
          %v677 = vpop.f32.mrf.mxu0
          %v678 = vadd.f32 %v652, %v677
          %679 = vmatmul.f32.gmra.mxu0 %v621
          %v680 = vpop.f32.mrf.mxu0
          %v681 = vadd.f32 %v652, %v680
          %682 = vmatmul.f32.gmra.mxu0 %v622
          %v683 = vpop.f32.mrf.mxu0
          %v684 = vadd.f32 %v652, %v683
          %685 = vmatmul.f32.gmra.mxu0 %v623
          %v686 = vpop.f32.mrf.mxu0
          %v687 = vadd.f32 %v652, %v686
          %688 = vmatmul.f32.gmra.mxu0 %v624
          %v689 = vpop.f32.mrf.mxu0
          %v690 = vadd.f32 %v652, %v689
          %691 = vmatmul.f32.gmra.mxu0 %v625
          %v692 = vpop.f32.mrf.mxu0
          %v693 = vadd.f32 %v652, %v692
          %694 = vmatmul.f32.gmra.mxu0 %v626
          %v695 = vpop.f32.mrf.mxu0
          %v696 = vadd.f32 %v652, %v695
          %697 = vmatmul.f32.gmra.mxu0 %v627
          %v698 = vpop.f32.mrf.mxu0
          %v699 = vadd.f32 %v652, %v698
          %700 = vmatmul.f32.gmra.mxu0 %v628
          %v701 = vpop.f32.mrf.mxu0
          %v702 = vadd.f32 %v652, %v701
          %703 = vmatmul.f32.gmra.mxu0 %v629
          %v704 = vpop.f32.mrf.mxu0
          %v705 = vadd.f32 %v652, %v704
          %706 = vmatmul.f32.gmra.mxu0 %v630
          %v707 = vpop.f32.mrf.mxu0
          %v708 = vadd.f32 %v652, %v707
          %709 = vmatmul.f32.gmra.mxu0 %v631
          %v710 = vpop.f32.mrf.mxu0
          %v711 = vadd.f32 %v652, %v710
          %712 = vmatmul.f32.gmra.mxu0 %v632
          %v713 = vpop.f32.mrf.mxu0
          %v714 = vadd.f32 %v652, %v713
          %715 = vmatmul.f32.gmra.mxu0 %v633
          %v716 = vpop.f32.mrf.mxu0
          %v717 = vadd.f32 %v652, %v716
          %718 = vdwg.mxu0
          %v719 = vmax.f32 %v672, 0.0
          %v720 = vmax.f32 %v675, 0.0
          %v721 = vmax.f32 %v678, 0.0
          %v722 = vmax.f32 %v681, 0.0
          %v723 = vmax.f32 %v684, 0.0
          %v724 = vmax.f32 %v687, 0.0
          %v725 = vmax.f32 %v690, 0.0
          %v726 = vmax.f32 %v693, 0.0
          %v727 = vmax.f32 %v696, 0.0
          %v728 = vmax.f32 %v699, 0.0
          %v729 = vmax.f32 %v702, 0.0
          %v730 = vmax.f32 %v705, 0.0
          %v731 = vmax.f32 %v708, 0.0
          %v732 = vmax.f32 %v711, 0.0
          %v733 = vmax.f32 %v714, 0.0
          %v734 = vmax.f32 %v717, 0.0
          %v735 = vld [vmem:[%s4] sm:$0xff]
          %v736 = vld [vmem:[%s4 + $0x8] sm:$0xff]
          %v737 = vld [vmem:[%s4 + $0x10] sm:$0xff]
          %v738 = vld [vmem:[%s4 + $0x18] sm:$0xff]
          %v739 = vld [vmem:[%s4 + $0x20] sm:$0xff]
          %v740 = vld [vmem:[%s4 + $0x28] sm:$0xff]
          %v741 = vld [vmem:[%s4 + $0x30] sm:$0xff]
          %v742 = vld [vmem:[%s4 + $0x38] sm:$0xff]
          %v743 = vld [vmem:[%s4 + $0x40] sm:$0xff]
          %v744 = vld [vmem:[%s4 + $0x48] sm:$0xff]
          %v745 = vld [vmem:[%s4 + $0x50] sm:$0xff]
          %v746 = vld [vmem:[%s4 + $0x58] sm:$0xff]
          %v747 = vld [vmem:[%s4 + $0x60] sm:$0xff]
          %v748 = vld [vmem:[%s4 + $0x68] sm:$0xff]
          %v749 = vld [vmem:[%s4 + $0x70] sm:$0xff]
          %v750 = vld [vmem:[%s4 + $0x78] sm:$0xff]
          %751 = vmatpush.msra.mxu0 %v750
          %752 = vmatpush.msra.mxu0 %v749
          %753 = vmatpush.msra.mxu0 %v748
          %754 = vmatpush.msra.mxu0 %v747
          %755 = vmatpush.msra.mxu0 %v746
          %756 = vmatpush.msra.mxu0 %v745
          %757 = vmatpush.msra.mxu0 %v744
          %758 = vmatpush.msra.mxu0 %v743
          %759 = vmatpush.msra.mxu0 %v742
          %760 = vmatpush.msra.mxu0 %v741
          %761 = vmatpush.msra.mxu0 %v740
          %762 = vmatpush.msra.mxu0 %v739
          %763 = vmatpush.msra.mxu0 %v738
          %764 = vmatpush.msra.mxu0 %v737
          %765 = vmatpush.msra.mxu0 %v736
          %766 = vmatpush.msra.mxu0 %v735
          %767 = vmatmul.f32.gmra.mxu0 %v719
          %v768 = vpop.f32.mrf.mxu0
          %v769 = vadd.f32 0.0, %v768
          %770 = vmatmul.f32.gmra.mxu0 %v720
          %v771 = vpop.f32.mrf.mxu0
          %v772 = vadd.f32 0.0, %v771
          %773 = vmatmul.f32.gmra.mxu0 %v721
          %v774 = vpop.f32.mrf.mxu0
          %v775 = vadd.f32 0.0, %v774
          %776 = vmatmul.f32.gmra.mxu0 %v722
          %v777 = vpop.f32.mrf.mxu0
          %v778 = vadd.f32 0.0, %v777
          %779 = vmatmul.f32.gmra.mxu0 %v723
          %v780 = vpop.f32.mrf.mxu0
          %v781 = vadd.f32 0.0, %v780
          %782 = vmatmul.f32.gmra.mxu0 %v724
          %v783 = vpop.f32.mrf.mxu0
          %v784 = vadd.f32 0.0, %v783
          %785 = vmatmul.f32.gmra.mxu0 %v725
          %v786 = vpop.f32.mrf.mxu0
          %v787 = vadd.f32 0.0, %v786
          %788 = vmatmul.f32.gmra.mxu0 %v726
          %v789 = vpop.f32.mrf.mxu0
          %v790 = vadd.f32 0.0, %v789
          %791 = vmatmul.f32.gmra.mxu0 %v727
          %v792 = vpop.f32.mrf.mxu0
          %v793 = vadd.f32 0.0, %v792
          %794 = vmatmul.f32.gmra.mxu0 %v728
          %v795 = vpop.f32.mrf.mxu0
          %v796 = vadd.f32 0.0, %v795
          %797 = vmatmul.f32.gmra.mxu0 %v729
          %v798 = vpop.f32.mrf.mxu0
          %v799 = vadd.f32 0.0, %v798
          %800 = vmatmul.f32.gmra.mxu0 %v730
          %v801 = vpop.f32.mrf.mxu0
          %v802 = vadd.f32 0.0, %v801
          %803 = vmatmul.f32.gmra.mxu0 %v731
          %v804 = vpop.f32.mrf.mxu0
          %v805 = vadd.f32 0.0, %v804
          %806 = vmatmul.f32.gmra.mxu0 %v732
          %v807 = vpop.f32.mrf.mxu0
          %v808 = vadd.f32 0.0, %v807
          %809 = vmatmul.f32.gmra.mxu0 %v733
          %v810 = vpop.f32.mrf.mxu0
          %v811 = vadd.f32 0.0, %v810
          %812 = vmatmul.f32.gmra.mxu0 %v734
          %v813 = vpop.f32.mrf.mxu0
          %v814 = vadd.f32 0.0, %v813
          %815 = vdwg.mxu0
          %v816 = vpack.c.bf16 %v769, %v769
          %v817 = vpack.c.bf16 %v772, %v772
          %v818 = vpack.c.bf16 %v775, %v775
          %v819 = vpack.c.bf16 %v778, %v778
          %v820 = vpack.c.bf16 %v781, %v781
          %v821 = vpack.c.bf16 %v784, %v784
          %v822 = vpack.c.bf16 %v787, %v787
          %v823 = vpack.c.bf16 %v790, %v790
          %v824 = vpack.c.bf16 %v793, %v793
          %v825 = vpack.c.bf16 %v796, %v796
          %v826 = vpack.c.bf16 %v799, %v799
          %v827 = vpack.c.bf16 %v802, %v802
          %v828 = vpack.c.bf16 %v805, %v805
          %v829 = vpack.c.bf16 %v808, %v808
          %v830 = vpack.c.bf16 %v811, %v811
          %v831 = vpack.c.bf16 %v814, %v814
          %832 = vst [vmem:[%s367] sm:$0xf] %v816
          %833 = vst [vmem:[%s367 + $0x4] sm:$0xf] %v817
          %834 = vst [vmem:[%s367 + $0x8] sm:$0xf] %v818
          %835 = vst [vmem:[%s367 + $0xc] sm:$0xf] %v819
          %836 = vst [vmem:[%s367 + $0x10] sm:$0xf] %v820
          %837 = vst [vmem:[%s367 + $0x14] sm:$0xf] %v821
          %838 = vst [vmem:[%s367 + $0x18] sm:$0xf] %v822
          %839 = vst [vmem:[%s367 + $0x1c] sm:$0xf] %v823
          %840 = vst [vmem:[%s367 + $0x20] sm:$0xf] %v824
          %841 = vst [vmem:[%s367 + $0x24] sm:$0xf] %v825
          %842 = vst [vmem:[%s367 + $0x28] sm:$0xf] %v826
          %843 = vst [vmem:[%s367 + $0x2c] sm:$0xf] %v827
          %844 = vst [vmem:[%s367 + $0x30] sm:$0xf] %v828
          %845 = vst [vmem:[%s367 + $0x34] sm:$0xf] %v829
          %846 = vst [vmem:[%s367 + $0x38] sm:$0xf] %v830
          %847 = vst [vmem:[%s367 + $0x3c] sm:$0xf] %v831
        $region89: #{encoder_forward.2} parent=76 // pred_fallthru
          _
        %s848 = smul.u32 16, %s20
        %p849 = scmp.lt.s32.totalorder %s848, 31
        %s850 = scalar_select %p849, %s848, 31
        %s851 = smul.addr %s850, 4
        %s852 = scalar_lea.vmem %s5, %s851
        // Predicated region
        $region90: #{encoder_forward.2} parent=76 // pred_check
          %p853 = pneg %p163
        $region91: #{encoder_forward.2} parent=76 // pred_check_branch
          %855 = sbr.rel (%p853) target = $region93
        $region92: #{encoder_forward.2} parent=76 // pred_region
          %s856 = smul.u32 16, %s20
        $region93: #{encoder_forward.2} parent=76 // pred_fallthru
          _
      $region77: #{encoder_forward.2} parent=5 // pred_fallthru
        _
      %p857 = scmp.le.s32.totalorder 2, %s11
      // Predicated region
      $region94: #{encoder_forward.2} parent=5 // pred_check
        %p858 = pneg %p857
      $region95: #{encoder_forward.2} parent=5 // pred_check_branch
        %860 = sbr.rel (%p858) target = $region97
      $region96: #{encoder_forward.2} parent=5 // pred_region
        %s861 = ssub.s32 %s11, 2
        // Predicated region
        $region98: #{encoder_forward.2} parent=96 // pred_check
          %p862 = pneg %p169
        $region99: #{encoder_forward.2} parent=96 // pred_check_branch
          %864 = sbr.rel (%p862) target = $region101
        $region100: #{encoder_forward.2} parent=96 // pred_region
          %s865 = smul.u32 16, %s22
          %p866 = scmp.lt.s32.totalorder %s865, 31
          %s867 = scalar_select %p866, %s865, 31
          %s868 = smul.addr %s867, 4
          %s869 = scalar_lea.vmem %s5, %s868
        $region101: #{encoder_forward.2} parent=96 // pred_fallthru
          _
      $region97: #{encoder_forward.2} parent=5 // pred_fallthru
        _
    $region6: #{encoder_forward.2} parent=1 // loop_footer
      %s15 = sadd.s32 1, %s11
    $region7: #{encoder_forward.2} parent=1 // loop_footer_branch
      %10 = sbr.rel target = $region3
    $region8: #{encoder_forward.2} parent=1 // loop_exit
      _

</llo_original>
